<compile_context>
chip_gen: v6e
topology: v6e:2x2x1
jax: 0.10.0
libtpu: 0.0.40
codegen_flags: <defaults>
</compile_context>

<pallas_src>
import functools

import jax
import jax.numpy as jnp
from jax import lax
from jax.experimental import pallas as pl
from jax.experimental.pallas import tpu as pltpu


# ----------------------------------------------------------------------------
# Fused kernel: qkv proj + attention + out proj for one (batch, q-tile)
# ----------------------------------------------------------------------------
def _fused_attention_kernel(
    x_ref,       # (1, C, Np)     x tokens, channels-first, full padded image
    wqkv_ref,    # (3*hidden, C)  bf16 qkv weight (q rows pre-scaled)
    wout_ref,    # (C, hidden)    bf16 output projection weight
    bout_ref,    # (C, 1)         f32 output projection bias
    o_ref,       # (1, C, TQ)     f32 output tile
    k_ref,       # scratch (hidden, Np) bf16 : K for current batch
    v_ref,       # scratch (hidden, Np) bf16 : V for current batch
    slab_ref,    # scratch (hidden, TQ) f32  : per-head attention output slab
    *,
    num_heads,
    head_dim,
    n_real,
):
    hidden = num_heads * head_dim
    tq = o_ref.shape[2]
    n_pad = k_ref.shape[1]

    w_qkv = wqkv_ref[...]                                   # (3*hidden, C) bf16, tiny

    # ---- K / V for the whole image: compute once per batch (first q tile) ----
    @pl.when(pl.program_id(1) == 0)
    def _():
        x_full = x_ref[0].astype(jnp.bfloat16)              # (C, Np)
        k_ref[...] = jnp.dot(w_qkv[hidden:2 * hidden], x_full,
                             preferred_element_type=jnp.float32).astype(jnp.bfloat16)
        v_ref[...] = jnp.dot(w_qkv[2 * hidden:], x_full,
                             preferred_element_type=jnp.float32).astype(jnp.bfloat16)

    # ---- Q projection for this tile (scale pre-folded into the weight) ----
    q_start = pl.multiple_of(pl.program_id(1) * tq, tq)
    x_q = x_ref[0, :, pl.ds(q_start, tq)].astype(jnp.bfloat16)       # (C, TQ)
    q = jnp.dot(w_qkv[:hidden], x_q,
                preferred_element_type=jnp.float32)                  # (hidden, TQ)
    q = q.astype(jnp.bfloat16)

    # ones block for lane-major softmax row-sums (hoisted out of the head loop)
    ones_keys = jnp.ones((8, n_pad), dtype=jnp.bfloat16)

    # ---- per-head attention, writing a lane-dense (hidden, TQ) slab ----
    for hh in range(num_heads):
        sl = slice(hh * head_dim, (hh + 1) * head_dim)
        qh = q[sl]                                          # (D, TQ) bf16
        kh = k_ref[sl, :]                                   # (D, Np) bf16
        vh = v_ref[sl, :]                                   # (D, Np) bf16

        # sim[i, j] = sum_d qh[d, i] * kh[d, j]
        sim = lax.dot_general(qh, kh, (((0,), (0,)), ((), ())),
                              preferred_element_type=jnp.float32)    # (TQ, Np) f32
        if n_real < n_pad:                                  # mask padded key columns
            col = lax.broadcasted_iota(jnp.int32, sim.shape, 1)
            sim = jnp.where(col < n_real, sim, -1e30)
        sim = sim - jnp.max(sim, axis=-1, keepdims=True)    # row-max stabilization
        p = jnp.exp(sim).astype(jnp.bfloat16)               # un-normalized probs

        # out[d, i] = sum_j vh[d, j] * p[i, j]   (deferred normalization)
        pv = lax.dot_general(vh, p, (((1,), (1,)), ((), ())),
                             preferred_element_type=jnp.float32)     # (D, TQ)
        # row-sums in lane-major orientation (8 identical rows; take row 0)
        lsum = lax.dot_general(ones_keys, p, (((1,), (1,)), ((), ())),
                               preferred_element_type=jnp.float32)   # (8, TQ)
        inv = pl.reciprocal(lsum[0:1, :], approx=True)               # (1, TQ)
        slab_ref[sl, :] = pv * inv                                   # (D, TQ) f32

    # ---- output projection (1x1 conv with bias), channels-first layout ----
    out_tok = slab_ref[...].astype(jnp.bfloat16)                     # (hidden, TQ)
    y = jnp.dot(wout_ref[...], out_tok,
                preferred_element_type=jnp.float32)                  # (C, TQ)
    o_ref[0] = (y + bout_ref[...]).astype(o_ref.dtype)


# ----------------------------------------------------------------------------
# Wrapper
# ----------------------------------------------------------------------------
def attention_forward(x_nchw, params, num_heads, head_dim, *, q_tile=128):
    """x_nchw: (b, in_dim, h, w) float32 -> (b, in_dim, h, w) float32."""
    assert q_tile % 128 == 0, "q_tile must be lane aligned"
    b, c, h, w = x_nchw.shape
    hidden = num_heads * head_dim
    n_real = h * w
    scale = head_dim ** (-0.5)

    # Pad the token axis to a multiple of the q tile (lane aligned).
    n_pad = ((n_real + q_tile - 1) // q_tile) * q_tile
    num_q = n_pad // q_tile

    # NCHW -> (b, C, N): pure reshape (no XLA transpose), then zero-pad tokens.
    x_cn = x_nchw.reshape(b, c, n_real)
    if n_pad != n_real:
        x_cn = jnp.pad(x_cn, ((0, 0), (0, 0), (0, n_pad - n_real)))

    # Fold q scale into the q rows of the qkv weight; cast weights to bf16.
    w_qkv = params["w_qkv"]                                   # (3*hidden, c)
    w_qkv = jnp.concatenate([w_qkv[:hidden] * scale, w_qkv[hidden:]], axis=0)
    w_qkv = w_qkv.astype(jnp.bfloat16)
    w_out = params["w_out"].astype(jnp.bfloat16)              # (c, hidden)
    b_out = params["b_out"].reshape(c, 1).astype(jnp.float32)  # (c, 1)

    grid = (b, num_q)

    flops = int(
        2 * b * n_pad * c * 3 * hidden                    # qkv projection
        + 4 * b * num_heads * n_pad * n_pad * head_dim    # QK^T + PV
        + 2 * b * num_heads * 8 * n_pad * n_pad           # row-sum matmuls
        + 2 * b * n_pad * hidden * c                      # out projection
    )
    transcendentals = int(b * num_heads * n_pad * n_pad)  # exp of the scores
    bytes_accessed = int(4 * 2 * b * c * n_pad            # x read + y write (f32)
                         + 2 * (3 * hidden * c + c * hidden) + 4 * c)

    kernel = functools.partial(
        _fused_attention_kernel,
        num_heads=num_heads, head_dim=head_dim, n_real=n_real)

    out_cn = pl.pallas_call(
        kernel,
        out_shape=jax.ShapeDtypeStruct((b, c, n_pad), jnp.float32),
        grid=grid,
        in_specs=[
            pl.BlockSpec((1, c, n_pad), lambda bi, qi: (bi, 0, 0)),    # x (per batch)
            pl.BlockSpec((3 * hidden, c), lambda bi, qi: (0, 0)),      # w_qkv (resident)
            pl.BlockSpec((c, hidden), lambda bi, qi: (0, 0)),          # w_out (resident)
            pl.BlockSpec((c, 1), lambda bi, qi: (0, 0)),               # bias  (resident)
        ],
        out_specs=pl.BlockSpec((1, c, q_tile), lambda bi, qi: (bi, 0, qi)),
        scratch_shapes=[
            pltpu.VMEM((hidden, n_pad), jnp.bfloat16),                 # K cache
            pltpu.VMEM((hidden, n_pad), jnp.bfloat16),                 # V cache
            pltpu.VMEM((hidden, q_tile), jnp.float32),                 # out slab
        ],
        compiler_params=pltpu.CompilerParams(
            # q axis is "arbitrary": it carries the per-batch K/V scratch dep.
            dimension_semantics=("parallel", "arbitrary"),
            vmem_limit_bytes=32 * 1024 * 1024,     # safe on v5e/v7x; sweep up on v6e
        ),
        cost_estimate=pl.CostEstimate(
            flops=flops,
            transcendentals=transcendentals,
            bytes_accessed=bytes_accessed,
        ),
    )(x_cn, w_qkv, w_out, b_out)

    if n_pad != n_real:
        out_cn = out_cn[:, :, :n_real]
    return out_cn.reshape(b, c, h, w)                                  # back to NCHW


# ----------------------------------------------------------------------------
# Pure-JAX reference (mirrors the PyTorch module exactly, f32)
# ----------------------------------------------------------------------------
def attention_forward_ref(x_nchw, params, num_heads, head_dim):
    b, c, h, w = x_nchw.shape
    hidden = num_heads * head_dim
    N = h * w
    scale = head_dim ** (-0.5)
    x_tok = jnp.transpose(x_nchw, (0, 2, 3, 1)).reshape(b, N, c)
    qkv = jnp.einsum("bnc,oc->bno", x_tok, params["w_qkv"])
    q, k, v = jnp.split(qkv, 3, axis=-1)
    reh = lambda t: jnp.transpose(t.reshape(b, N, num_heads, head_dim), (0, 2, 1, 3))
    q, k, v = reh(q) * scale, reh(k), reh(v)
    sim = jnp.einsum("bhid,bhjd->bhij", q, k)
    sim = sim - jnp.max(sim, axis=-1, keepdims=True)
    attn = jax.nn.softmax(sim, axis=-1)
    out = jnp.einsum("bhij,bhjd->bhid", attn, v)
    out = jnp.transpose(out, (0, 2, 1, 3)).reshape(b, N, hidden)
    y = jnp.einsum("bnh,oh->bno", out, params["w_out"]) + params["b_out"]
    return jnp.transpose(y.reshape(b, h, w, c), (0, 3, 1, 2))


# ----------------------------------------------------------------------------
if __name__ == "__main__":
    in_dim, num_heads, head_dim = 4, 4, 32        # module defaults
    hidden = num_heads * head_dim

    key = jax.random.PRNGKey(0)
    k1, k2, k3, k4, k5 = jax.random.split(key, 5)
    params = {
        "w_qkv": jax.random.normal(k1, (3 * hidden, in_dim), jnp.float32) * 0.05,
        "w_out": jax.random.normal(k2, (in_dim, hidden), jnp.float32) * 0.05,
        "b_out": jax.random.normal(k3, (in_dim,), jnp.float32) * 0.01,
    }

    fwd = jax.jit(functools.partial(
        attention_forward, num_heads=num_heads, head_dim=head_dim))

    # --- main check: lane-aligned image (N = 256 -> two 128-token q tiles) ---
    b, h, w = 2, 16, 16
    x = jax.random.normal(k4, (b, in_dim, h, w), jnp.float32)
    y = jax.block_until_ready(fwd(x, params))
    y_ref = attention_forward_ref(x, params, num_heads, head_dim)
    assert y.shape == (b, in_dim, h, w)
    # tolerance covers bf16 MXU operands + approx softmax reciprocal
    assert jnp.allclose(y, y_ref, atol=5e-3, rtol=2e-2), "mismatch vs reference"

    # --- padded-N check: 10x10 image (N = 100 -> padded & masked to 128) ---
    xp = jax.random.normal(k5, (1, in_dim, 10, 10), jnp.float32)
    yp = jax.block_until_ready(fwd(xp, params))
    yp_ref = attention_forward_ref(xp, params, num_heads, head_dim)
    assert jnp.allclose(yp, yp_ref, atol=5e-3, rtol=2e-2), "mismatch (padded N)"

    print("KERNEL_OK")
</pallas_src>

<mosaic_0001>
module attributes {stable_mosaic.version = 11 : i64} {
  func.func @_fused_attention_kernel(%arg0: i32, %arg1: i32, %arg2: memref<1x4x256xf32, #tpu.memory_space<vmem>>, %arg3: memref<384x4xbf16, #tpu.memory_space<vmem>>, %arg4: memref<4x128xbf16, #tpu.memory_space<vmem>>, %arg5: memref<4x1xf32, #tpu.memory_space<vmem>>, %arg6: memref<1x4x128xf32, #tpu.memory_space<vmem>>, %arg7: memref<128x256xbf16, #tpu.memory_space<vmem>>, %arg8: memref<128x256xbf16, #tpu.memory_space<vmem>>, %arg9: memref<128x128xf32, #tpu.memory_space<vmem>>) attributes {dimension_semantics = [#tpu.dimension_semantics<parallel>, #tpu.dimension_semantics<arbitrary>], iteration_bounds = array<i64: 2, 2>, scalar_prefetch = 0 : i64, scratch_operands = 3 : i64, tpu.core_type = #tpu.core_type<tc>, window_params = [{transform_indices = @transform_0, window_bounds = array<i64: 1, 4, 256>}, {pipeline_mode = #tpu.pipeline_mode<synchronous>, transform_indices = @transform_1, window_bounds = array<i64: 384, 4>}, {pipeline_mode = #tpu.pipeline_mode<synchronous>, transform_indices = @transform_2, window_bounds = array<i64: 4, 128>}, {pipeline_mode = #tpu.pipeline_mode<synchronous>, transform_indices = @transform_3, window_bounds = array<i64: 4, 1>}, {transform_indices = @transform_4, window_bounds = array<i64: 1, 4, 128>}]} {
    %c0 = arith.constant 0 : index
    %c0_0 = arith.constant 0 : index
    %0 = vector.load %arg3[%c0, %c0_0] : memref<384x4xbf16, #tpu.memory_space<vmem>>, vector<384x4xbf16>
    %c0_i32 = arith.constant 0 : i32
    %1 = arith.cmpi eq, %arg1, %c0_i32 : i32
    %2 = arith.extui %1 : i1 to i32
    %c0_i32_1 = arith.constant 0 : i32
    %3 = arith.cmpi ne, %2, %c0_i32_1 : i32
    scf.if %3 {
      %c0_52 = arith.constant 0 : index
      %c0_53 = arith.constant 0 : index
      %c0_54 = arith.constant 0 : index
      %92 = vector.load %arg2[%c0_52, %c0_53, %c0_54] : memref<1x4x256xf32, #tpu.memory_space<vmem>>, vector<1x4x256xf32>
      %93 = vector.shape_cast %92 : vector<1x4x256xf32> to vector<4x256xf32>
      %94 = arith.truncf %93 : vector<4x256xf32> to vector<4x256xbf16>
      %95 = vector.extract_strided_slice %0 {offsets = [128, 0], sizes = [128, 4], strides = [1, 1]} : vector<384x4xbf16> to vector<128x4xbf16>
      %cst_55 = arith.constant dense<0.000000e+00> : vector<128x256xf32>
      %96 = tpu.matmul %95, %94, %cst_55 {dimension_numbers = #tpu.dot_dimension_numbers<[1], [0], [0], [1], [0, 0, 1, 1], [], []>} : vector<128x4xbf16>, vector<4x256xbf16>, vector<128x256xf32> -> vector<128x256xf32>
      %97 = arith.truncf %96 : vector<128x256xf32> to vector<128x256xbf16>
      %c0_56 = arith.constant 0 : index
      %c0_57 = arith.constant 0 : index
      %98 = vector.load %arg7[%c0_56, %c0_57] : memref<128x256xbf16, #tpu.memory_space<vmem>>, vector<128x256xbf16>
      tpu.vector_store %arg7[%c0_56, %c0_57], %97 {strides = array<i32>} : memref<128x256xbf16, #tpu.memory_space<vmem>>, vector<128x256xbf16>,
      %99 = vector.extract_strided_slice %0 {offsets = [256, 0], sizes = [128, 4], strides = [1, 1]} : vector<384x4xbf16> to vector<128x4xbf16>
      %cst_58 = arith.constant dense<0.000000e+00> : vector<128x256xf32>
      %100 = tpu.matmul %99, %94, %cst_58 {dimension_numbers = #tpu.dot_dimension_numbers<[1], [0], [0], [1], [0, 0, 1, 1], [], []>} : vector<128x4xbf16>, vector<4x256xbf16>, vector<128x256xf32> -> vector<128x256xf32>
      %101 = arith.truncf %100 : vector<128x256xf32> to vector<128x256xbf16>
      %c0_59 = arith.constant 0 : index
      %c0_60 = arith.constant 0 : index
      %102 = vector.load %arg8[%c0_59, %c0_60] : memref<128x256xbf16, #tpu.memory_space<vmem>>, vector<128x256xbf16>
      tpu.vector_store %arg8[%c0_59, %c0_60], %101 {strides = array<i32>} : memref<128x256xbf16, #tpu.memory_space<vmem>>, vector<128x256xbf16>,
    } else {
    }
    %c128_i32 = arith.constant 128 : i32
    %4 = arith.muli %arg1, %c128_i32 : i32
    %5 = tpu.assume_multiple %4, 128 : i32
    %c0_2 = arith.constant 0 : index
    %c0_3 = arith.constant 0 : index
    %6 = arith.index_cast %5 : i32 to index
    %7 = vector.load %arg2[%c0_2, %c0_3, %6] : memref<1x4x256xf32, #tpu.memory_space<vmem>>, vector<1x4x128xf32>
    %8 = vector.shape_cast %7 : vector<1x4x128xf32> to vector<4x128xf32>
    %9 = arith.truncf %8 : vector<4x128xf32> to vector<4x128xbf16>
    %10 = vector.extract_strided_slice %0 {offsets = [0, 0], sizes = [128, 4], strides = [1, 1]} : vector<384x4xbf16> to vector<128x4xbf16>
    %cst = arith.constant dense<0.000000e+00> : vector<128x128xf32>
    %11 = tpu.matmul %10, %9, %cst {dimension_numbers = #tpu.dot_dimension_numbers<[1], [0], [0], [1], [0, 0, 1, 1], [], []>} : vector<128x4xbf16>, vector<4x128xbf16>, vector<128x128xf32> -> vector<128x128xf32>
    %12 = arith.truncf %11 : vector<128x128xf32> to vector<128x128xbf16>
    %cst_4 = arith.constant 1.000000e+00 : bf16
    %13 = vector.broadcast %cst_4 : bf16 to vector<8x256xbf16>
    %14 = vector.extract_strided_slice %12 {offsets = [0, 0], sizes = [32, 128], strides = [1, 1]} : vector<128x128xbf16> to vector<32x128xbf16>
    %c0_5 = arith.constant 0 : index
    %c0_6 = arith.constant 0 : index
    %15 = vector.load %arg7[%c0_5, %c0_6] : memref<128x256xbf16, #tpu.memory_space<vmem>>, vector<32x256xbf16>
    %c0_7 = arith.constant 0 : index
    %c0_8 = arith.constant 0 : index
    %16 = vector.load %arg8[%c0_7, %c0_8] : memref<128x256xbf16, #tpu.memory_space<vmem>>, vector<32x256xbf16>
    %cst_9 = arith.constant dense<0.000000e+00> : vector<128x256xf32>
    %17 = tpu.matmul %14, %15, %cst_9 {dimension_numbers = #tpu.dot_dimension_numbers<[0], [0], [1], [1], [0, 1, 1, 1], [], []>} : vector<32x128xbf16>, vector<32x256xbf16>, vector<128x256xf32> -> vector<128x256xf32>
    %cst_10 = arith.constant dense<0xFF800000> : vector<128xf32>
    %18 = vector.multi_reduction <maximumf>, %17, %cst_10 [1] : vector<128x256xf32> to vector<128xf32>
    %19 = vector.shape_cast %18 : vector<128xf32> to vector<128x1xf32>
    %20 = vector.broadcast %19 : vector<128x1xf32> to vector<128x256xf32>
    %21 = arith.subf %17, %20 : vector<128x256xf32>
    %22 = math.exp %21 : vector<128x256xf32>
    %23 = arith.truncf %22 : vector<128x256xf32> to vector<128x256xbf16>
    %cst_11 = arith.constant dense<0.000000e+00> : vector<32x128xf32>
    %24 = tpu.matmul %16, %23, %cst_11 {dimension_numbers = #tpu.dot_dimension_numbers<[1], [1], [0], [0], [0, 0, 1, 0], [], []>} : vector<32x256xbf16>, vector<128x256xbf16>, vector<32x128xf32> -> vector<32x128xf32>
    %cst_12 = arith.constant dense<0.000000e+00> : vector<8x128xf32>
    %25 = tpu.matmul %13, %23, %cst_12 {dimension_numbers = #tpu.dot_dimension_numbers<[1], [1], [0], [0], [0, 0, 1, 0], [], []>} : vector<8x256xbf16>, vector<128x256xbf16>, vector<8x128xf32> -> vector<8x128xf32>
    %26 = vector.extract_strided_slice %25 {offsets = [0, 0], sizes = [1, 128], strides = [1, 1]} : vector<8x128xf32> to vector<1x128xf32>
    %27 = tpu.reciprocal %26 {approx = true} : vector<1x128xf32> -> vector<1x128xf32>
    %28 = vector.broadcast %27 : vector<1x128xf32> to vector<32x128xf32>
    %29 = arith.mulf %24, %28 : vector<32x128xf32>
    %c0_13 = arith.constant 0 : index
    %c0_14 = arith.constant 0 : index
    %30 = vector.load %arg9[%c0_13, %c0_14] : memref<128x128xf32, #tpu.memory_space<vmem>>, vector<32x128xf32>
    tpu.vector_store %arg9[%c0_13, %c0_14], %29 {strides = array<i32>} : memref<128x128xf32, #tpu.memory_space<vmem>>, vector<32x128xf32>,
    %31 = vector.extract_strided_slice %12 {offsets = [32, 0], sizes = [32, 128], strides = [1, 1]} : vector<128x128xbf16> to vector<32x128xbf16>
    %c32 = arith.constant 32 : index
    %c0_15 = arith.constant 0 : index
    %32 = vector.load %arg7[%c32, %c0_15] : memref<128x256xbf16, #tpu.memory_space<vmem>>, vector<32x256xbf16>
    %c32_16 = arith.constant 32 : index
    %c0_17 = arith.constant 0 : index
    %33 = vector.load %arg8[%c32_16, %c0_17] : memref<128x256xbf16, #tpu.memory_space<vmem>>, vector<32x256xbf16>
    %cst_18 = arith.constant dense<0.000000e+00> : vector<128x256xf32>
    %34 = tpu.matmul %31, %32, %cst_18 {dimension_numbers = #tpu.dot_dimension_numbers<[0], [0], [1], [1], [0, 1, 1, 1], [], []>} : vector<32x128xbf16>, vector<32x256xbf16>, vector<128x256xf32> -> vector<128x256xf32>
    %cst_19 = arith.constant dense<0xFF800000> : vector<128xf32>
    %35 = vector.multi_reduction <maximumf>, %34, %cst_19 [1] : vector<128x256xf32> to vector<128xf32>
    %36 = vector.shape_cast %35 : vector<128xf32> to vector<128x1xf32>
    %37 = vector.broadcast %36 : vector<128x1xf32> to vector<128x256xf32>
    %38 = arith.subf %34, %37 : vector<128x256xf32>
    %39 = math.exp %38 : vector<128x256xf32>
    %40 = arith.truncf %39 : vector<128x256xf32> to vector<128x256xbf16>
    %cst_20 = arith.constant dense<0.000000e+00> : vector<32x128xf32>
    %41 = tpu.matmul %33, %40, %cst_20 {dimension_numbers = #tpu.dot_dimension_numbers<[1], [1], [0], [0], [0, 0, 1, 0], [], []>} : vector<32x256xbf16>, vector<128x256xbf16>, vector<32x128xf32> -> vector<32x128xf32>
    %cst_21 = arith.constant dense<0.000000e+00> : vector<8x128xf32>
    %42 = tpu.matmul %13, %40, %cst_21 {dimension_numbers = #tpu.dot_dimension_numbers<[1], [1], [0], [0], [0, 0, 1, 0], [], []>} : vector<8x256xbf16>, vector<128x256xbf16>, vector<8x128xf32> -> vector<8x128xf32>
    %43 = vector.extract_strided_slice %42 {offsets = [0, 0], sizes = [1, 128], strides = [1, 1]} : vector<8x128xf32> to vector<1x128xf32>
    %44 = tpu.reciprocal %43 {approx = true} : vector<1x128xf32> -> vector<1x128xf32>
    %45 = vector.broadcast %44 : vector<1x128xf32> to vector<32x128xf32>
    %46 = arith.mulf %41, %45 : vector<32x128xf32>
    %c32_22 = arith.constant 32 : index
    %c0_23 = arith.constant 0 : index
    %47 = vector.load %arg9[%c32_22, %c0_23] : memref<128x128xf32, #tpu.memory_space<vmem>>, vector<32x128xf32>
    tpu.vector_store %arg9[%c32_22, %c0_23], %46 {strides = array<i32>} : memref<128x128xf32, #tpu.memory_space<vmem>>, vector<32x128xf32>,
    %48 = vector.extract_strided_slice %12 {offsets = [64, 0], sizes = [32, 128], strides = [1, 1]} : vector<128x128xbf16> to vector<32x128xbf16>
    %c64 = arith.constant 64 : index
    %c0_24 = arith.constant 0 : index
    %49 = vector.load %arg7[%c64, %c0_24] : memref<128x256xbf16, #tpu.memory_space<vmem>>, vector<32x256xbf16>
    %c64_25 = arith.constant 64 : index
    %c0_26 = arith.constant 0 : index
    %50 = vector.load %arg8[%c64_25, %c0_26] : memref<128x256xbf16, #tpu.memory_space<vmem>>, vector<32x256xbf16>
    %cst_27 = arith.constant dense<0.000000e+00> : vector<128x256xf32>
    %51 = tpu.matmul %48, %49, %cst_27 {dimension_numbers = #tpu.dot_dimension_numbers<[0], [0], [1], [1], [0, 1, 1, 1], [], []>} : vector<32x128xbf16>, vector<32x256xbf16>, vector<128x256xf32> -> vector<128x256xf32>
    %cst_28 = arith.constant dense<0xFF800000> : vector<128xf32>
    %52 = vector.multi_reduction <maximumf>, %51, %cst_28 [1] : vector<128x256xf32> to vector<128xf32>
    %53 = vector.shape_cast %52 : vector<128xf32> to vector<128x1xf32>
    %54 = vector.broadcast %53 : vector<128x1xf32> to vector<128x256xf32>
    %55 = arith.subf %51, %54 : vector<128x256xf32>
    %56 = math.exp %55 : vector<128x256xf32>
    %57 = arith.truncf %56 : vector<128x256xf32> to vector<128x256xbf16>
    %cst_29 = arith.constant dense<0.000000e+00> : vector<32x128xf32>
    %58 = tpu.matmul %50, %57, %cst_29 {dimension_numbers = #tpu.dot_dimension_numbers<[1], [1], [0], [0], [0, 0, 1, 0], [], []>} : vector<32x256xbf16>, vector<128x256xbf16>, vector<32x128xf32> -> vector<32x128xf32>
    %cst_30 = arith.constant dense<0.000000e+00> : vector<8x128xf32>
    %59 = tpu.matmul %13, %57, %cst_30 {dimension_numbers = #tpu.dot_dimension_numbers<[1], [1], [0], [0], [0, 0, 1, 0], [], []>} : vector<8x256xbf16>, vector<128x256xbf16>, vector<8x128xf32> -> vector<8x128xf32>
    %60 = vector.extract_strided_slice %59 {offsets = [0, 0], sizes = [1, 128], strides = [1, 1]} : vector<8x128xf32> to vector<1x128xf32>
    %61 = tpu.reciprocal %60 {approx = true} : vector<1x128xf32> -> vector<1x128xf32>
    %62 = vector.broadcast %61 : vector<1x128xf32> to vector<32x128xf32>
    %63 = arith.mulf %58, %62 : vector<32x128xf32>
    %c64_31 = arith.constant 64 : index
    %c0_32 = arith.constant 0 : index
    %64 = vector.load %arg9[%c64_31, %c0_32] : memref<128x128xf32, #tpu.memory_space<vmem>>, vector<32x128xf32>
    tpu.vector_store %arg9[%c64_31, %c0_32], %63 {strides = array<i32>} : memref<128x128xf32, #tpu.memory_space<vmem>>, vector<32x128xf32>,
    %65 = vector.extract_strided_slice %12 {offsets = [96, 0], sizes = [32, 128], strides = [1, 1]} : vector<128x128xbf16> to vector<32x128xbf16>
    %c96 = arith.constant 96 : index
    %c0_33 = arith.constant 0 : index
    %66 = vector.load %arg7[%c96, %c0_33] : memref<128x256xbf16, #tpu.memory_space<vmem>>, vector<32x256xbf16>
    %c96_34 = arith.constant 96 : index
    %c0_35 = arith.constant 0 : index
    %67 = vector.load %arg8[%c96_34, %c0_35] : memref<128x256xbf16, #tpu.memory_space<vmem>>, vector<32x256xbf16>
    %cst_36 = arith.constant dense<0.000000e+00> : vector<128x256xf32>
    %68 = tpu.matmul %65, %66, %cst_36 {dimension_numbers = #tpu.dot_dimension_numbers<[0], [0], [1], [1], [0, 1, 1, 1], [], []>} : vector<32x128xbf16>, vector<32x256xbf16>, vector<128x256xf32> -> vector<128x256xf32>
    %cst_37 = arith.constant dense<0xFF800000> : vector<128xf32>
    %69 = vector.multi_reduction <maximumf>, %68, %cst_37 [1] : vector<128x256xf32> to vector<128xf32>
    %70 = vector.shape_cast %69 : vector<128xf32> to vector<128x1xf32>
    %71 = vector.broadcast %70 : vector<128x1xf32> to vector<128x256xf32>
    %72 = arith.subf %68, %71 : vector<128x256xf32>
    %73 = math.exp %72 : vector<128x256xf32>
    %74 = arith.truncf %73 : vector<128x256xf32> to vector<128x256xbf16>
    %cst_38 = arith.constant dense<0.000000e+00> : vector<32x128xf32>
    %75 = tpu.matmul %67, %74, %cst_38 {dimension_numbers = #tpu.dot_dimension_numbers<[1], [1], [0], [0], [0, 0, 1, 0], [], []>} : vector<32x256xbf16>, vector<128x256xbf16>, vector<32x128xf32> -> vector<32x128xf32>
    %cst_39 = arith.constant dense<0.000000e+00> : vector<8x128xf32>
    %76 = tpu.matmul %13, %74, %cst_39 {dimension_numbers = #tpu.dot_dimension_numbers<[1], [1], [0], [0], [0, 0, 1, 0], [], []>} : vector<8x256xbf16>, vector<128x256xbf16>, vector<8x128xf32> -> vector<8x128xf32>
    %77 = vector.extract_strided_slice %76 {offsets = [0, 0], sizes = [1, 128], strides = [1, 1]} : vector<8x128xf32> to vector<1x128xf32>
    %78 = tpu.reciprocal %77 {approx = true} : vector<1x128xf32> -> vector<1x128xf32>
    %79 = vector.broadcast %78 : vector<1x128xf32> to vector<32x128xf32>
    %80 = arith.mulf %75, %79 : vector<32x128xf32>
    %c96_40 = arith.constant 96 : index
    %c0_41 = arith.constant 0 : index
    %81 = vector.load %arg9[%c96_40, %c0_41] : memref<128x128xf32, #tpu.memory_space<vmem>>, vector<32x128xf32>
    tpu.vector_store %arg9[%c96_40, %c0_41], %80 {strides = array<i32>} : memref<128x128xf32, #tpu.memory_space<vmem>>, vector<32x128xf32>,
    %c0_42 = arith.constant 0 : index
    %c0_43 = arith.constant 0 : index
    %82 = vector.load %arg9[%c0_42, %c0_43] : memref<128x128xf32, #tpu.memory_space<vmem>>, vector<128x128xf32>
    %83 = arith.truncf %82 : vector<128x128xf32> to vector<128x128xbf16>
    %c0_44 = arith.constant 0 : index
    %c0_45 = arith.constant 0 : index
    %84 = vector.load %arg4[%c0_44, %c0_45] : memref<4x128xbf16, #tpu.memory_space<vmem>>, vector<4x128xbf16>
    %cst_46 = arith.constant dense<0.000000e+00> : vector<4x128xf32>
    %85 = tpu.matmul %84, %83, %cst_46 {dimension_numbers = #tpu.dot_dimension_numbers<[1], [0], [0], [1], [0, 0, 1, 1], [], []>} : vector<4x128xbf16>, vector<128x128xbf16>, vector<4x128xf32> -> vector<4x128xf32>
    %c0_47 = arith.constant 0 : index
    %c0_48 = arith.constant 0 : index
    %86 = vector.load %arg5[%c0_47, %c0_48] : memref<4x1xf32, #tpu.memory_space<vmem>>, vector<4x1xf32>
    %87 = vector.broadcast %86 : vector<4x1xf32> to vector<4x128xf32>
    %88 = arith.addf %85, %87 : vector<4x128xf32>
    %c0_49 = arith.constant 0 : index
    %c0_50 = arith.constant 0 : index
    %c0_51 = arith.constant 0 : index
    %89 = vector.load %arg6[%c0_49, %c0_50, %c0_51] : memref<1x4x128xf32, #tpu.memory_space<vmem>>, vector<1x4x128xf32>
    %90 = vector.shape_cast %89 : vector<1x4x128xf32> to vector<4x128xf32>
    %91 = vector.shape_cast %88 : vector<4x128xf32> to vector<1x4x128xf32>
    tpu.vector_store %arg6[%c0_49, %c0_50, %c0_51], %91 {strides = array<i32>} : memref<1x4x128xf32, #tpu.memory_space<vmem>>, vector<1x4x128xf32>,
    return
  }
  func.func @transform_0(%arg0: i32, %arg1: i32) -> (i32, i32, i32) {
    %c0_i32 = arith.constant 0 : i32
    %c0_i32_0 = arith.constant 0 : i32
    %c0_i32_1 = arith.constant 0 : i32
    return %arg0, %c0_i32, %c0_i32_0 : i32, i32, i32
  }
  func.func @transform_1(%arg0: i32, %arg1: i32) -> (i32, i32) {
    %c0_i32 = arith.constant 0 : i32
    %c0_i32_0 = arith.constant 0 : i32
    %c0_i32_1 = arith.constant 0 : i32
    return %c0_i32, %c0_i32_0 : i32, i32
  }
  func.func @transform_2(%arg0: i32, %arg1: i32) -> (i32, i32) {
    %c0_i32 = arith.constant 0 : i32
    %c0_i32_0 = arith.constant 0 : i32
    %c0_i32_1 = arith.constant 0 : i32
    return %c0_i32, %c0_i32_0 : i32, i32
  }
  func.func @transform_3(%arg0: i32, %arg1: i32) -> (i32, i32) {
    %c0_i32 = arith.constant 0 : i32
    %c0_i32_0 = arith.constant 0 : i32
    %c0_i32_1 = arith.constant 0 : i32
    return %c0_i32, %c0_i32_0 : i32, i32
  }
  func.func @transform_4(%arg0: i32, %arg1: i32) -> (i32, i32, i32) {
    %c0_i32 = arith.constant 0 : i32
    %c0_i32_0 = arith.constant 0 : i32
    return %arg0, %c0_i32, %arg1 : i32, i32, i32
  }
}

</mosaic_0001>

<llo_original>
// kernel: attention_forward.1
$region0: #{attention_forward.1}
  #allocation0 [shape = 'u32[]', space=smem, size = 0x4, offset = 0x4, fixed_abs, tag = 'smem constant byte address 0x4 - core index']
  #allocation1 [shape = 'u32[144,128]{1,0:T(1,128)}', space=vmem, size = 0x12000, scoped, tag = 'internal scratch']
  #allocation2 [shape = 'bf16[128,256]{1,0:T(8,128)(2,1)}', space=vmem, size = 0x10000, scoped, tag = 'scratch operand']
  #allocation3 [shape = 'bf16[128,256]{1,0:T(8,128)(2,1)}', space=vmem, size = 0x10000, scoped, tag = 'scratch operand']
  #allocation4 [shape = 'f32[128,128]{1,0:T(8,128)}', space=vmem, size = 0x10000, scoped, tag = 'scratch operand']
  %s0 = inlined_call_operand.vmem [shape: f32[2,4,256], index: 0, kind: input, shape index: {}]
  %s1 = inlined_call_operand.vmem [shape: bf16[384,4], index: 1, kind: input, shape index: {}]
  %s2 = inlined_call_operand.vmem [shape: bf16[4,128], index: 2, kind: input, shape index: {}]
  %s3 = inlined_call_operand.vmem [shape: f32[4,1], index: 3, kind: input, shape index: {}]
  %s4 = inlined_call_operand.vmem [shape: f32[2,4,256], index: 4, kind: output, shape index: {}]
  %s5 = sld [smem:[#allocation0]]
  $region53: #{attention_forward.1} parent=0
    _
  %s7 = ssub.s32 1, %s5
  %s8 = scalar_select 0, %s7, %s5
  loop: start=0, step=1, limit=6
  $region2: #{attention_forward.1} parent=0 // loop_pre_header
    _
  $region3: #{attention_forward.1} parent=0 // loop_header
    %s10 = sphi 0, %s14
    %p11 = scmp.ge.s32.totalorder %s10, 6
    %s17 = sphi 0, %s29
    %s18 = sphi 0, %s25
    %s19 = sphi 0, %s17
    %s20 = sphi 0, %s18
    %s21 = sphi 0, %s19
    %s22 = sphi 0, %s20
    %s32 = sphi 0, %s34
    %s35 = sphi 0, %s32
    %s36 = sphi 0, %s35
    %s52 = sphi 0, %s36
    %s56 = sphi 0, %s56
    %s58 = sphi 0, %s56
    %s59 = sphi 0, %s58
    %s73 = sphi 0, %s59
    %s77 = sphi 0, %s77
    %s79 = sphi 0, %s77
    %s80 = sphi 0, %s79
    %s94 = sphi 0, %s80
    %s98 = sphi 0, %s98
    %s100 = sphi 0, %s98
    %s101 = sphi 0, %s100
    %s115 = sphi 0, %s101
    %s123 = sphi 0, %s125
    %s126 = sphi 0, %s123
    %s127 = sphi 0, %s126
    %s143 = sphi 0, %s127
  $region4: #{attention_forward.1} parent=0 // loop_header_branch
    %13 = sbr.rel (%p11) target = $region8
  $region5: #{attention_forward.1} parent=0 // loop_body
    %s15 = ssub.s32 %s10, 1
    %s16 = ssub.s32 %s10, 2
    %s23 = sadd.s32 1, %s18
    %p24 = scmp.ge.s32.totalorder %s23, 2
    %s25 = scalar_select %p24, 0, %s23
    %s26 = sadd.s32 1, %s17
    %s27 = scalar_select %p24, %s26, %s17
    %p28 = scmp.ge.s32.totalorder %s27, 2
    %s29 = scalar_select %p28, 0, %s27
    %s30 = ssub.s32 %s17, %s29
    %p31 = scmp.eq.s32.totalorder %s30, 0
    %s33 = sadd.s32 %s32, 1
    %s34 = scalar_select %p31, %s32, %s33
    %p37 = pneg %p31
    %p38 = scmp.eq.s32.totalorder %s10, 3
    %p39 = por %p37, %p38
    %p40 = scmp.ne.s32.totalorder %s32, %s35
    %p41 = scmp.eq.s32.totalorder %s10, 0
    %p42 = por %p40, %p41
    %p43 = scmp.ne.s32.totalorder %s32, %s35
    %p44 = scmp.eq.s32.totalorder %s15, 3
    %p45 = por %p43, %p44
    %p46 = scmp.ne.s32.totalorder %s35, %s36
    %p47 = scmp.eq.s32.totalorder %s15, 0
    %p48 = por %p46, %p47
    %p49 = scmp.ne.s32.totalorder %s35, %s36
    %p50 = scmp.eq.s32.totalorder %s16, 3
    %p51 = por %p49, %p50
    %p53 = scmp.ne.s32.totalorder %s36, %s52
    %p54 = scmp.eq.s32.totalorder %s16, 0
    %p55 = por %p53, %p54
    %s57 = sadd.s32 %s56, 1
    %p60 = scmp.eq.s32.totalorder %s10, 3
    %p61 = scmp.ne.s32.totalorder %s56, %s58
    %p62 = scmp.eq.s32.totalorder %s10, 0
    %p63 = por %p61, %p62
    %p64 = scmp.ne.s32.totalorder %s56, %s58
    %p65 = scmp.eq.s32.totalorder %s15, 3
    %p66 = por %p64, %p65
    %p67 = scmp.ne.s32.totalorder %s58, %s59
    %p68 = scmp.eq.s32.totalorder %s15, 0
    %p69 = por %p67, %p68
    %p70 = scmp.ne.s32.totalorder %s58, %s59
    %p71 = scmp.eq.s32.totalorder %s16, 3
    %p72 = por %p70, %p71
    %p74 = scmp.ne.s32.totalorder %s59, %s73
    %p75 = scmp.eq.s32.totalorder %s16, 0
    %p76 = por %p74, %p75
    %s78 = sadd.s32 %s77, 1
    %p81 = scmp.eq.s32.totalorder %s10, 3
    %p82 = scmp.ne.s32.totalorder %s77, %s79
    %p83 = scmp.eq.s32.totalorder %s10, 0
    %p84 = por %p82, %p83
    %p85 = scmp.ne.s32.totalorder %s77, %s79
    %p86 = scmp.eq.s32.totalorder %s15, 3
    %p87 = por %p85, %p86
    %p88 = scmp.ne.s32.totalorder %s79, %s80
    %p89 = scmp.eq.s32.totalorder %s15, 0
    %p90 = por %p88, %p89
    %p91 = scmp.ne.s32.totalorder %s79, %s80
    %p92 = scmp.eq.s32.totalorder %s16, 3
    %p93 = por %p91, %p92
    %p95 = scmp.ne.s32.totalorder %s80, %s94
    %p96 = scmp.eq.s32.totalorder %s16, 0
    %p97 = por %p95, %p96
    %s99 = sadd.s32 %s98, 1
    %p102 = scmp.eq.s32.totalorder %s10, 3
    %p103 = scmp.ne.s32.totalorder %s98, %s100
    %p104 = scmp.eq.s32.totalorder %s10, 0
    %p105 = por %p103, %p104
    %p106 = scmp.ne.s32.totalorder %s98, %s100
    %p107 = scmp.eq.s32.totalorder %s15, 3
    %p108 = por %p106, %p107
    %p109 = scmp.ne.s32.totalorder %s100, %s101
    %p110 = scmp.eq.s32.totalorder %s15, 0
    %p111 = por %p109, %p110
    %p112 = scmp.ne.s32.totalorder %s100, %s101
    %p113 = scmp.eq.s32.totalorder %s16, 3
    %p114 = por %p112, %p113
    %p116 = scmp.ne.s32.totalorder %s101, %s115
    %p117 = scmp.eq.s32.totalorder %s16, 0
    %p118 = por %p116, %p117
    %s119 = ssub.s32 %s17, %s29
    %s120 = ssub.s32 %s18, %s25
    %s121 = sor.u32 %s119, %s120
    %p122 = scmp.eq.s32.totalorder %s121, 0
    %s124 = sadd.s32 %s123, 1
    %s125 = scalar_select %p122, %s123, %s124
    %p128 = pneg %p122
    %p129 = scmp.eq.s32.totalorder %s10, 3
    %p130 = por %p128, %p129
    %p131 = scmp.ne.s32.totalorder %s123, %s126
    %p132 = scmp.eq.s32.totalorder %s10, 0
    %p133 = por %p131, %p132
    %p134 = scmp.ne.s32.totalorder %s123, %s126
    %p135 = scmp.eq.s32.totalorder %s15, 3
    %p136 = por %p134, %p135
    %p137 = scmp.ne.s32.totalorder %s126, %s127
    %p138 = scmp.eq.s32.totalorder %s15, 0
    %p139 = por %p137, %p138
    %p140 = scmp.ne.s32.totalorder %s126, %s127
    %p141 = scmp.eq.s32.totalorder %s16, 3
    %p142 = por %p140, %p141
    %p144 = scmp.ne.s32.totalorder %s127, %s143
    %p145 = scmp.eq.s32.totalorder %s16, 0
    %p146 = por %p144, %p145
    %p147 = scmp.le.s32.totalorder 1, %s10
    %p148 = scmp.lt.s32.totalorder %s10, 5
    %p149 = pnand %p147, %p148
    %p150 = pneg %p149
    // Predicated region
    $region9: #{attention_forward.1} parent=5 // pred_check
      _
    $region10: #{attention_forward.1} parent=5 // pred_check_branch
      %152 = sbr.rel (%p149) target = $region12
    $region11: #{attention_forward.1} parent=5 // pred_region
      %s153 = ssub.s32 %s10, 1
      // Predicated region
      $region13: #{attention_forward.1} parent=11 // pred_check
        %p154 = pneg %p69
      $region14: #{attention_forward.1} parent=11 // pred_check_branch
        %156 = sbr.rel (%p154) target = $region16
      $region15: #{attention_forward.1} parent=11 // pred_region
        _
      $region16: #{attention_forward.1} parent=11 // pred_fallthru
        _
      // Predicated region
      $region17: #{attention_forward.1} parent=11 // pred_check
        %p157 = pneg %p90
      $region18: #{attention_forward.1} parent=11 // pred_check_branch
        %159 = sbr.rel (%p157) target = $region20
      $region19: #{attention_forward.1} parent=11 // pred_region
        _
      $region20: #{attention_forward.1} parent=11 // pred_fallthru
        _
      // Predicated region
      $region21: #{attention_forward.1} parent=11 // pred_check
        %p160 = pneg %p111
      $region22: #{attention_forward.1} parent=11 // pred_check_branch
        %162 = sbr.rel (%p160) target = $region24
      $region23: #{attention_forward.1} parent=11 // pred_region
        _
      $region24: #{attention_forward.1} parent=11 // pred_fallthru
        _
    $region12: #{attention_forward.1} parent=5 // pred_fallthru
      _
    %p163 = scmp.lt.s32.totalorder %s10, 4
    // Predicated region
    $region25: #{attention_forward.1} parent=5 // pred_check
      %p164 = pneg %p163
    $region26: #{attention_forward.1} parent=5 // pred_check_branch
      %166 = sbr.rel (%p164) target = $region28
    $region27: #{attention_forward.1} parent=5 // pred_region
      // Predicated region
      $region29: #{attention_forward.1} parent=27 // pred_check
        %p167 = pneg %p42
      $region30: #{attention_forward.1} parent=27 // pred_check_branch
        %169 = sbr.rel (%p167) target = $region32
      $region31: #{attention_forward.1} parent=27 // pred_region
        %p170 = scmp.lt.s32.totalorder %s17, 1
        %s171 = scalar_select %p170, %s17, 1
        %s172 = smul.addr %s171, 2
        %s173 = smul.addr %s172, 4
        %s174 = scalar_lea.vmem %s0, %s173
      $region32: #{attention_forward.1} parent=27 // pred_fallthru
        _
    $region28: #{attention_forward.1} parent=5 // pred_fallthru
      _
    %p175 = scmp.le.s32.totalorder 1, %s10
    %p176 = scmp.lt.s32.totalorder %s10, 5
    %p177 = pnand %p175, %p176
    %p178 = pneg %p177
    // Predicated region
    $region33: #{attention_forward.1} parent=5 // pred_check
      _
    $region34: #{attention_forward.1} parent=5 // pred_check_branch
      %180 = sbr.rel (%p177) target = $region36
    $region35: #{attention_forward.1} parent=5 // pred_region
      %s181 = ssub.s32 %s10, 1
      %p182 = scmp.lt.s32.totalorder %s19, 1
      %s183 = scalar_select %p182, %s19, 1
      %s184 = smul.addr %s183, 2
      %s185 = smul.addr %s184, 4
      %s186 = scalar_lea.vmem %s0, %s185
      %p187 = pneg %p48
      %p188 = pneg %p45
      %p189 = pneg %p69
      %p190 = pneg %p66
      %p191 = pneg %p90
      %p192 = pneg %p87
      %p193 = pneg %p111
      %p194 = pneg %p108
      %p195 = pneg %p139
      %p196 = pneg %p136
      %p197 = scmp.lt.s32.totalorder %s19, 1
      %s198 = scalar_select %p197, %s19, 1
      %p199 = scmp.lt.s32.totalorder %s20, 1
      %s200 = scalar_select %p199, %s20, 1
      %s201 = smul.addr %s198, 2
      %s202 = sadd.s32 %s200, %s201
      %s203 = smul.addr %s202, 4
      %s204 = scalar_lea.vmem %s4, %s203
      %p205 = scmp.lt.s32.totalorder %s19, 1
      %s206 = scalar_select %p205, %s19, 1
      %s207 = smul.addr %s206, 2
      %s208 = smul.addr %s207, 4
      %s209 = scalar_lea.vmem %s0, %s208
      %p210 = scmp.lt.s32.totalorder %s19, 1
      %s211 = scalar_select %p210, %s19, 1
      %p212 = scmp.lt.s32.totalorder %s20, 1
      %s213 = scalar_select %p212, %s20, 1
      %s214 = smul.addr %s211, 2
      %s215 = sadd.s32 %s213, %s214
      %s216 = smul.addr %s215, 4
      %s217 = scalar_lea.vmem %s4, %s216
      %v220 = vld [vmem:[%s1] sm:$0xf]
      %v221 = vld [vmem:[%s1 + $0x4] sm:$0xf]
      %v222 = vld [vmem:[%s1 + $0x8] sm:$0xf]
      %v223 = vld [vmem:[%s1 + $0xc] sm:$0xf]
      %v224 = vld [vmem:[%s1 + $0x10] sm:$0xf]
      %v225 = vld [vmem:[%s1 + $0x14] sm:$0xf]
      %v226 = vld [vmem:[%s1 + $0x18] sm:$0xf]
      %v227 = vld [vmem:[%s1 + $0x1c] sm:$0xf]
      %v228 = vld [vmem:[%s1 + $0x20] sm:$0xf]
      %v229 = vld [vmem:[%s1 + $0x24] sm:$0xf]
      %v230 = vld [vmem:[%s1 + $0x28] sm:$0xf]
      %v231 = vld [vmem:[%s1 + $0x2c] sm:$0xf]
      %v232 = vld [vmem:[%s1 + $0x30] sm:$0xf]
      %v233 = vld [vmem:[%s1 + $0x34] sm:$0xf]
      %v234 = vld [vmem:[%s1 + $0x38] sm:$0xf]
      %v235 = vld [vmem:[%s1 + $0x3c] sm:$0xf]
      %v236 = vld [vmem:[%s1 + $0x40] sm:$0xf]
      %v237 = vld [vmem:[%s1 + $0x44] sm:$0xf]
      %v238 = vld [vmem:[%s1 + $0x48] sm:$0xf]
      %v239 = vld [vmem:[%s1 + $0x4c] sm:$0xf]
      %v240 = vld [vmem:[%s1 + $0x50] sm:$0xf]
      %v241 = vld [vmem:[%s1 + $0x54] sm:$0xf]
      %v242 = vld [vmem:[%s1 + $0x58] sm:$0xf]
      %v243 = vld [vmem:[%s1 + $0x5c] sm:$0xf]
      %v244 = vld [vmem:[%s1 + $0x60] sm:$0xf]
      %v245 = vld [vmem:[%s1 + $0x64] sm:$0xf]
      %v246 = vld [vmem:[%s1 + $0x68] sm:$0xf]
      %v247 = vld [vmem:[%s1 + $0x6c] sm:$0xf]
      %v248 = vld [vmem:[%s1 + $0x70] sm:$0xf]
      %v249 = vld [vmem:[%s1 + $0x74] sm:$0xf]
      %v250 = vld [vmem:[%s1 + $0x78] sm:$0xf]
      %v251 = vld [vmem:[%s1 + $0x7c] sm:$0xf]
      %v252 = vld [vmem:[%s1 + $0x80] sm:$0xf]
      %v253 = vld [vmem:[%s1 + $0x84] sm:$0xf]
      %v254 = vld [vmem:[%s1 + $0x88] sm:$0xf]
      %v255 = vld [vmem:[%s1 + $0x8c] sm:$0xf]
      %v256 = vld [vmem:[%s1 + $0x90] sm:$0xf]
      %v257 = vld [vmem:[%s1 + $0x94] sm:$0xf]
      %v258 = vld [vmem:[%s1 + $0x98] sm:$0xf]
      %v259 = vld [vmem:[%s1 + $0x9c] sm:$0xf]
      %v260 = vld [vmem:[%s1 + $0xa0] sm:$0xf]
      %v261 = vld [vmem:[%s1 + $0xa4] sm:$0xf]
      %v262 = vld [vmem:[%s1 + $0xa8] sm:$0xf]
      %v263 = vld [vmem:[%s1 + $0xac] sm:$0xf]
      %v264 = vld [vmem:[%s1 + $0xb0] sm:$0xf]
      %v265 = vld [vmem:[%s1 + $0xb4] sm:$0xf]
      %v266 = vld [vmem:[%s1 + $0xb8] sm:$0xf]
      %v267 = vld [vmem:[%s1 + $0xbc] sm:$0xf]
      %p268 = scmp.eq.s32.totalorder %s20, 0
      // Predicated region
      $region37: #{attention_forward.1} parent=35 // pred_check
        %p269 = pneg %p268
      $region38: #{attention_forward.1} parent=35 // pred_check_branch
        %271 = sbr.rel (%p269) target = $region40
      $region39: #{attention_forward.1} parent=35 // pred_region
        %v272 = vld [vmem:[%s209] sm:$0xff]
        %v274 = vcombine.high %v272, %v272
        %v276 = vpack.c.bf16 %v272, %v272
        %v277 = vpack.c.bf16 %v274, %v274
        %v294 = vunpack.c.l.b16 %v236
        %v295 = vunpack.c.l.b16 %v237
        %v296 = vunpack.c.l.b16 %v238
        %v297 = vunpack.c.l.b16 %v239
        %v298 = vunpack.c.l.b16 %v240
        %v299 = vunpack.c.l.b16 %v241
        %v300 = vunpack.c.l.b16 %v242
        %v301 = vunpack.c.l.b16 %v243
        %v302 = vunpack.c.l.b16 %v244
        %v303 = vunpack.c.l.b16 %v245
        %v304 = vunpack.c.l.b16 %v246
        %v305 = vunpack.c.l.b16 %v247
        %v306 = vunpack.c.l.b16 %v248
        %v307 = vunpack.c.l.b16 %v249
        %v308 = vunpack.c.l.b16 %v250
        %v309 = vunpack.c.l.b16 %v251
        %v310 = vpack.c.b16 %v295, %v294
        %v311 = vpack.c.b16 %v297, %v296
        %v312 = vpack.c.b16 %v299, %v298
        %v313 = vpack.c.b16 %v301, %v300
        %v314 = vpack.c.b16 %v303, %v302
        %v315 = vpack.c.b16 %v305, %v304
        %v316 = vpack.c.b16 %v307, %v306
        %v317 = vpack.c.b16 %v309, %v308
        %vm318 = vcmask 31744
        %v320 = vsel %vm318, %v310, 0
        %v323 = vsel %vm318, %v311, 0
        %v326 = vsel %vm318, %v312, 0
        %v329 = vsel %vm318, %v313, 0
        %v332 = vsel %vm318, %v314, 0
        %v335 = vsel %vm318, %v315, 0
        %v338 = vsel %vm318, %v316, 0
        %v341 = vsel %vm318, %v317, 0
        %vm343 = vcmask 1041408
        %v345 = vsel %vm343, %v276, 0
        %v348 = vsel %vm343, %v277, 0
        %350 = vmatprep.subr.bf16.mxu0 0
        %351 = vmatpush1.bf16.msra.mxu0 0
        %352 = vmatprep.subr.bf16.mxu0 0
        %353 = vmatpush1.bf16.msra.mxu0 0
        %354 = vmatprep.subr.bf16.mxu0 0
        %355 = vmatpush1.bf16.msra.mxu0 0
        %356 = vmatprep.subr.bf16.mxu0 0
        %357 = vmatpush1.bf16.msra.mxu0 0
        %358 = vmatprep.subr.bf16.mxu0 0
        %359 = vmatpush1.bf16.msra.mxu0 0
        %360 = vmatprep.subr.bf16.mxu0 0
        %361 = vmatpush1.bf16.msra.mxu0 0
        %362 = vmatprep.subr.bf16.mxu0 0
        %363 = vmatpush1.bf16.msra.mxu0 0
        %364 = vmatprep.subr.bf16.mxu0 %v348
        %365 = vmatpush1.bf16.msra.mxu0 %v345
        %366 = vmatprep.subr.bf16.mxu0 0
        %367 = vmatpush2.bf16.msra.mxu0 0
        %368 = vmatprep.subr.bf16.mxu0 0
        %369 = vmatpush2.bf16.msra.mxu0 0
        %370 = vmatprep.subr.bf16.mxu0 0
        %371 = vmatpush2.bf16.msra.mxu0 0
        %372 = vmatprep.subr.bf16.mxu0 0
        %373 = vmatpush2.bf16.msra.mxu0 0
        %374 = vmatprep.subr.bf16.mxu0 0
        %375 = vmatpush2.bf16.msra.mxu0 0
        %376 = vmatprep.subr.bf16.mxu0 0
        %377 = vmatpush2.bf16.msra.mxu0 0
        %378 = vmatprep.subr.bf16.mxu0 0
        %379 = vmatpush2.bf16.msra.mxu0 0
        %380 = vmatprep.subr.bf16.mxu0 0
        %381 = vmatpush2.bf16.msra.mxu0 0
        %382 = vmatprep.mubr.bf16.mxu0 0
        %383 = vmatmul.mubr.bf16.gmra.mxu0 %v320
        %v384 = vpop.f32.mrf.mxu0
        %v385 = vadd.f32 0.0, %v384
        %v386 = vpop.f32.mrf.mxu0
        %v387 = vadd.f32 0.0, %v386
        %v388 = vpop.f32.mrf.mxu0
        %v389 = vadd.f32 0.0, %v388
        %v390 = vpop.f32.mrf.mxu0
        %v391 = vadd.f32 0.0, %v390
        %392 = vmatprep.mubr.bf16.mxu0 0
        %393 = vmatmul.mubr.bf16.gmra.mxu0 %v323
        %v394 = vpop.f32.mrf.mxu0
        %v395 = vadd.f32 0.0, %v394
        %v396 = vpop.f32.mrf.mxu0
        %v397 = vadd.f32 0.0, %v396
        %v398 = vpop.f32.mrf.mxu0
        %v399 = vadd.f32 0.0, %v398
        %v400 = vpop.f32.mrf.mxu0
        %v401 = vadd.f32 0.0, %v400
        %402 = vmatprep.mubr.bf16.mxu0 0
        %403 = vmatmul.mubr.bf16.gmra.mxu0 %v326
        %v404 = vpop.f32.mrf.mxu0
        %v405 = vadd.f32 0.0, %v404
        %v406 = vpop.f32.mrf.mxu0
        %v407 = vadd.f32 0.0, %v406
        %v408 = vpop.f32.mrf.mxu0
        %v409 = vadd.f32 0.0, %v408
        %v410 = vpop.f32.mrf.mxu0
        %v411 = vadd.f32 0.0, %v410
        %412 = vmatprep.mubr.bf16.mxu0 0
        %413 = vmatmul.mubr.bf16.gmra.mxu0 %v329
        %v414 = vpop.f32.mrf.mxu0
        %v415 = vadd.f32 0.0, %v414
        %v416 = vpop.f32.mrf.mxu0
        %v417 = vadd.f32 0.0, %v416
        %v418 = vpop.f32.mrf.mxu0
        %v419 = vadd.f32 0.0, %v418
        %v420 = vpop.f32.mrf.mxu0
        %v421 = vadd.f32 0.0, %v420
        %422 = vmatprep.mubr.bf16.mxu0 0
        %423 = vmatmul.mubr.bf16.gmra.mxu0 %v332
        %v424 = vpop.f32.mrf.mxu0
        %v425 = vadd.f32 0.0, %v424
        %v426 = vpop.f32.mrf.mxu0
        %v427 = vadd.f32 0.0, %v426
        %v428 = vpop.f32.mrf.mxu0
        %v429 = vadd.f32 0.0, %v428
        %v430 = vpop.f32.mrf.mxu0
        %v431 = vadd.f32 0.0, %v430
        %432 = vmatprep.mubr.bf16.mxu0 0
        %433 = vmatmul.mubr.bf16.gmra.mxu0 %v335
        %v434 = vpop.f32.mrf.mxu0
        %v435 = vadd.f32 0.0, %v434
        %v436 = vpop.f32.mrf.mxu0
        %v437 = vadd.f32 0.0, %v436
        %v438 = vpop.f32.mrf.mxu0
        %v439 = vadd.f32 0.0, %v438
        %v440 = vpop.f32.mrf.mxu0
        %v441 = vadd.f32 0.0, %v440
        %442 = vmatprep.mubr.bf16.mxu0 0
        %443 = vmatmul.mubr.bf16.gmra.mxu0 %v338
        %v444 = vpop.f32.mrf.mxu0
        %v445 = vadd.f32 0.0, %v444
        %v446 = vpop.f32.mrf.mxu0
        %v447 = vadd.f32 0.0, %v446
        %v448 = vpop.f32.mrf.mxu0
        %v449 = vadd.f32 0.0, %v448
        %v450 = vpop.f32.mrf.mxu0
        %v451 = vadd.f32 0.0, %v450
        %452 = vmatprep.mubr.bf16.mxu0 0
        %453 = vmatmul.mubr.bf16.gmra.mxu0 %v341
        %v454 = vpop.f32.mrf.mxu0
        %v455 = vadd.f32 0.0, %v454
        %v456 = vpop.f32.mrf.mxu0
        %v457 = vadd.f32 0.0, %v456
        %v458 = vpop.f32.mrf.mxu0
        %v459 = vadd.f32 0.0, %v458
        %v460 = vpop.f32.mrf.mxu0
        %v461 = vadd.f32 0.0, %v460
        %462 = vdwg.mxu0
        %v463 = vpack.c.bf16 %v389, %v385
        %v464 = vpack.c.bf16 %v391, %v387
        %v465 = vpack.c.bf16 %v399, %v395
        %v466 = vpack.c.bf16 %v401, %v397
        %v467 = vpack.c.bf16 %v409, %v405
        %v468 = vpack.c.bf16 %v411, %v407
        %v469 = vpack.c.bf16 %v419, %v415
        %v470 = vpack.c.bf16 %v421, %v417
        %v471 = vpack.c.bf16 %v429, %v425
        %v472 = vpack.c.bf16 %v431, %v427
        %v473 = vpack.c.bf16 %v439, %v435
        %v474 = vpack.c.bf16 %v441, %v437
        %v475 = vpack.c.bf16 %v449, %v445
        %v476 = vpack.c.bf16 %v451, %v447
        %v477 = vpack.c.bf16 %v459, %v455
        %v478 = vpack.c.bf16 %v461, %v457
        %v495 = vunpack.c.l.b16 %v463
        %v496 = vunpack.c.l.b16 %v464
        %v497 = vunpack.c.h.b16 %v463
        %v498 = vunpack.c.h.b16 %v464
        %v499 = vunpack.c.l.b16 %v465
        %v500 = vunpack.c.l.b16 %v466
        %v501 = vunpack.c.h.b16 %v465
        %v502 = vunpack.c.h.b16 %v466
        %v503 = vunpack.c.l.b16 %v467
        %v504 = vunpack.c.l.b16 %v468
        %v505 = vunpack.c.h.b16 %v467
        %v506 = vunpack.c.h.b16 %v468
        %v507 = vunpack.c.l.b16 %v469
        %v508 = vunpack.c.l.b16 %v470
        %v509 = vunpack.c.h.b16 %v469
        %v510 = vunpack.c.h.b16 %v470
        %v511 = vunpack.c.l.b16 %v471
        %v512 = vunpack.c.l.b16 %v472
        %v513 = vunpack.c.h.b16 %v471
        %v514 = vunpack.c.h.b16 %v472
        %v515 = vunpack.c.l.b16 %v473
        %v516 = vunpack.c.l.b16 %v474
        %v517 = vunpack.c.h.b16 %v473
        %v518 = vunpack.c.h.b16 %v474
        %v519 = vunpack.c.l.b16 %v475
        %v520 = vunpack.c.l.b16 %v476
        %v521 = vunpack.c.h.b16 %v475
        %v522 = vunpack.c.h.b16 %v476
        %v523 = vunpack.c.l.b16 %v477
        %v524 = vunpack.c.l.b16 %v478
        %v525 = vunpack.c.h.b16 %v477
        %v526 = vunpack.c.h.b16 %v478
        %v527 = vpack.c.b16 %v496, %v495
        %v528 = vpack.c.b16 %v498, %v497
        %v529 = vpack.c.b16 %v500, %v499
        %v530 = vpack.c.b16 %v502, %v501
        %v531 = vpack.c.b16 %v504, %v503
        %v532 = vpack.c.b16 %v506, %v505
        %v533 = vpack.c.b16 %v508, %v507
        %v534 = vpack.c.b16 %v510, %v509
        %v535 = vpack.c.b16 %v512, %v511
        %v536 = vpack.c.b16 %v514, %v513
        %v537 = vpack.c.b16 %v516, %v515
        %v538 = vpack.c.b16 %v518, %v517
        %v539 = vpack.c.b16 %v520, %v519
        %v540 = vpack.c.b16 %v522, %v521
        %v541 = vpack.c.b16 %v524, %v523
        %v542 = vpack.c.b16 %v526, %v525
        %559 = vst [vmem:[#allocation2] sm:$0xff] %v527
        %560 = vst [vmem:[#allocation2 + $0x8] sm:$0xff] %v528
        %561 = vst [vmem:[#allocation2 + $0x10] sm:$0xff] %v529
        %562 = vst [vmem:[#allocation2 + $0x18] sm:$0xff] %v530
        %563 = vst [vmem:[#allocation2 + $0x20] sm:$0xff] %v531
        %564 = vst [vmem:[#allocation2 + $0x28] sm:$0xff] %v532
        %565 = vst [vmem:[#allocation2 + $0x30] sm:$0xff] %v533
        %566 = vst [vmem:[#allocation2 + $0x38] sm:$0xff] %v534
        %567 = vst [vmem:[#allocation2 + $0x40] sm:$0xff] %v535
        %568 = vst [vmem:[#allocation2 + $0x48] sm:$0xff] %v536
        %569 = vst [vmem:[#allocation2 + $0x50] sm:$0xff] %v537
        %570 = vst [vmem:[#allocation2 + $0x58] sm:$0xff] %v538
        %571 = vst [vmem:[#allocation2 + $0x60] sm:$0xff] %v539
        %572 = vst [vmem:[#allocation2 + $0x68] sm:$0xff] %v540
        %573 = vst [vmem:[#allocation2 + $0x70] sm:$0xff] %v541
        %574 = vst [vmem:[#allocation2 + $0x78] sm:$0xff] %v542
        %v591 = vunpack.c.l.b16 %v252
        %v592 = vunpack.c.l.b16 %v253
        %v593 = vunpack.c.l.b16 %v254
        %v594 = vunpack.c.l.b16 %v255
        %v595 = vunpack.c.l.b16 %v256
        %v596 = vunpack.c.l.b16 %v257
        %v597 = vunpack.c.l.b16 %v258
        %v598 = vunpack.c.l.b16 %v259
        %v599 = vunpack.c.l.b16 %v260
        %v600 = vunpack.c.l.b16 %v261
        %v601 = vunpack.c.l.b16 %v262
        %v602 = vunpack.c.l.b16 %v263
        %v603 = vunpack.c.l.b16 %v264
        %v604 = vunpack.c.l.b16 %v265
        %v605 = vunpack.c.l.b16 %v266
        %v606 = vunpack.c.l.b16 %v267
        %v607 = vpack.c.b16 %v592, %v591
        %v608 = vpack.c.b16 %v594, %v593
        %v609 = vpack.c.b16 %v596, %v595
        %v610 = vpack.c.b16 %v598, %v597
        %v611 = vpack.c.b16 %v600, %v599
        %v612 = vpack.c.b16 %v602, %v601
        %v613 = vpack.c.b16 %v604, %v603
        %v614 = vpack.c.b16 %v606, %v605
        %v616 = vsel %vm318, %v607, 0
        %v619 = vsel %vm318, %v608, 0
        %v622 = vsel %vm318, %v609, 0
        %v625 = vsel %vm318, %v610, 0
        %v628 = vsel %vm318, %v611, 0
        %v631 = vsel %vm318, %v612, 0
        %v634 = vsel %vm318, %v613, 0
        %v637 = vsel %vm318, %v614, 0
        %639 = vmatprep.subr.bf16.mxu0 0
        %640 = vmatpush1.bf16.msra.mxu0 0
        %641 = vmatprep.subr.bf16.mxu0 0
        %642 = vmatpush1.bf16.msra.mxu0 0
        %643 = vmatprep.subr.bf16.mxu0 0
        %644 = vmatpush1.bf16.msra.mxu0 0
        %645 = vmatprep.subr.bf16.mxu0 0
        %646 = vmatpush1.bf16.msra.mxu0 0
        %647 = vmatprep.subr.bf16.mxu0 0
        %648 = vmatpush1.bf16.msra.mxu0 0
        %649 = vmatprep.subr.bf16.mxu0 0
        %650 = vmatpush1.bf16.msra.mxu0 0
        %651 = vmatprep.subr.bf16.mxu0 0
        %652 = vmatpush1.bf16.msra.mxu0 0
        %653 = vmatprep.subr.bf16.mxu0 %v348
        %654 = vmatpush1.bf16.msra.mxu0 %v345
        %655 = vmatprep.subr.bf16.mxu0 0
        %656 = vmatpush2.bf16.msra.mxu0 0
        %657 = vmatprep.subr.bf16.mxu0 0
        %658 = vmatpush2.bf16.msra.mxu0 0
        %659 = vmatprep.subr.bf16.mxu0 0
        %660 = vmatpush2.bf16.msra.mxu0 0
        %661 = vmatprep.subr.bf16.mxu0 0
        %662 = vmatpush2.bf16.msra.mxu0 0
        %663 = vmatprep.subr.bf16.mxu0 0
        %664 = vmatpush2.bf16.msra.mxu0 0
        %665 = vmatprep.subr.bf16.mxu0 0
        %666 = vmatpush2.bf16.msra.mxu0 0
        %667 = vmatprep.subr.bf16.mxu0 0
        %668 = vmatpush2.bf16.msra.mxu0 0
        %669 = vmatprep.subr.bf16.mxu0 0
        %670 = vmatpush2.bf16.msra.mxu0 0
        %671 = vmatprep.mubr.bf16.mxu0 0
        %672 = vmatmul.mubr.bf16.gmra.mxu0 %v616
        %v673 = vpop.f32.mrf.mxu0
        %v674 = vadd.f32 0.0, %v673
        %v675 = vpop.f32.mrf.mxu0
        %v676 = vadd.f32 0.0, %v675
        %v677 = vpop.f32.mrf.mxu0
        %v678 = vadd.f32 0.0, %v677
        %v679 = vpop.f32.mrf.mxu0
        %v680 = vadd.f32 0.0, %v679
        %681 = vmatprep.mubr.bf16.mxu0 0
        %682 = vmatmul.mubr.bf16.gmra.mxu0 %v619
        %v683 = vpop.f32.mrf.mxu0
        %v684 = vadd.f32 0.0, %v683
        %v685 = vpop.f32.mrf.mxu0
        %v686 = vadd.f32 0.0, %v685
        %v687 = vpop.f32.mrf.mxu0
        %v688 = vadd.f32 0.0, %v687
        %v689 = vpop.f32.mrf.mxu0
        %v690 = vadd.f32 0.0, %v689
        %691 = vmatprep.mubr.bf16.mxu0 0
        %692 = vmatmul.mubr.bf16.gmra.mxu0 %v622
        %v693 = vpop.f32.mrf.mxu0
        %v694 = vadd.f32 0.0, %v693
        %v695 = vpop.f32.mrf.mxu0
        %v696 = vadd.f32 0.0, %v695
        %v697 = vpop.f32.mrf.mxu0
        %v698 = vadd.f32 0.0, %v697
        %v699 = vpop.f32.mrf.mxu0
        %v700 = vadd.f32 0.0, %v699
        %701 = vmatprep.mubr.bf16.mxu0 0
        %702 = vmatmul.mubr.bf16.gmra.mxu0 %v625
        %v703 = vpop.f32.mrf.mxu0
        %v704 = vadd.f32 0.0, %v703
        %v705 = vpop.f32.mrf.mxu0
        %v706 = vadd.f32 0.0, %v705
        %v707 = vpop.f32.mrf.mxu0
        %v708 = vadd.f32 0.0, %v707
        %v709 = vpop.f32.mrf.mxu0
        %v710 = vadd.f32 0.0, %v709
        %711 = vmatprep.mubr.bf16.mxu0 0
        %712 = vmatmul.mubr.bf16.gmra.mxu0 %v628
        %v713 = vpop.f32.mrf.mxu0
        %v714 = vadd.f32 0.0, %v713
        %v715 = vpop.f32.mrf.mxu0
        %v716 = vadd.f32 0.0, %v715
        %v717 = vpop.f32.mrf.mxu0
        %v718 = vadd.f32 0.0, %v717
        %v719 = vpop.f32.mrf.mxu0
        %v720 = vadd.f32 0.0, %v719
        %721 = vmatprep.mubr.bf16.mxu0 0
        %722 = vmatmul.mubr.bf16.gmra.mxu0 %v631
        %v723 = vpop.f32.mrf.mxu0
        %v724 = vadd.f32 0.0, %v723
        %v725 = vpop.f32.mrf.mxu0
        %v726 = vadd.f32 0.0, %v725
        %v727 = vpop.f32.mrf.mxu0
        %v728 = vadd.f32 0.0, %v727
        %v729 = vpop.f32.mrf.mxu0
        %v730 = vadd.f32 0.0, %v729
        %731 = vmatprep.mubr.bf16.mxu0 0
        %732 = vmatmul.mubr.bf16.gmra.mxu0 %v634
        %v733 = vpop.f32.mrf.mxu0
        %v734 = vadd.f32 0.0, %v733
        %v735 = vpop.f32.mrf.mxu0
        %v736 = vadd.f32 0.0, %v735
        %v737 = vpop.f32.mrf.mxu0
        %v738 = vadd.f32 0.0, %v737
        %v739 = vpop.f32.mrf.mxu0
        %v740 = vadd.f32 0.0, %v739
        %741 = vmatprep.mubr.bf16.mxu0 0
        %742 = vmatmul.mubr.bf16.gmra.mxu0 %v637
        %v743 = vpop.f32.mrf.mxu0
        %v744 = vadd.f32 0.0, %v743
        %v745 = vpop.f32.mrf.mxu0
        %v746 = vadd.f32 0.0, %v745
        %v747 = vpop.f32.mrf.mxu0
        %v748 = vadd.f32 0.0, %v747
        %v749 = vpop.f32.mrf.mxu0
        %v750 = vadd.f32 0.0, %v749
        %751 = vdwg.mxu0
        %v752 = vpack.c.bf16 %v678, %v674
        %v753 = vpack.c.bf16 %v680, %v676
        %v754 = vpack.c.bf16 %v688, %v684
        %v755 = vpack.c.bf16 %v690, %v686
        %v756 = vpack.c.bf16 %v698, %v694
        %v757 = vpack.c.bf16 %v700, %v696
        %v758 = vpack.c.bf16 %v708, %v704
        %v759 = vpack.c.bf16 %v710, %v706
        %v760 = vpack.c.bf16 %v718, %v714
        %v761 = vpack.c.bf16 %v720, %v716
        %v762 = vpack.c.bf16 %v728, %v724
        %v763 = vpack.c.bf16 %v730, %v726
        %v764 = vpack.c.bf16 %v738, %v734
        %v765 = vpack.c.bf16 %v740, %v736
        %v766 = vpack.c.bf16 %v748, %v744
        %v767 = vpack.c.bf16 %v750, %v746
        %v784 = vunpack.c.l.b16 %v752
        %v785 = vunpack.c.l.b16 %v753
        %v786 = vunpack.c.h.b16 %v752
        %v787 = vunpack.c.h.b16 %v753
        %v788 = vunpack.c.l.b16 %v754
        %v789 = vunpack.c.l.b16 %v755
        %v790 = vunpack.c.h.b16 %v754
        %v791 = vunpack.c.h.b16 %v755
        %v792 = vunpack.c.l.b16 %v756
        %v793 = vunpack.c.l.b16 %v757
        %v794 = vunpack.c.h.b16 %v756
        %v795 = vunpack.c.h.b16 %v757
        %v796 = vunpack.c.l.b16 %v758
        %v797 = vunpack.c.l.b16 %v759
        %v798 = vunpack.c.h.b16 %v758
        %v799 = vunpack.c.h.b16 %v759
        %v800 = vunpack.c.l.b16 %v760
        %v801 = vunpack.c.l.b16 %v761
        %v802 = vunpack.c.h.b16 %v760
        %v803 = vunpack.c.h.b16 %v761
        %v804 = vunpack.c.l.b16 %v762
        %v805 = vunpack.c.l.b16 %v763
        %v806 = vunpack.c.h.b16 %v762
        %v807 = vunpack.c.h.b16 %v763
        %v808 = vunpack.c.l.b16 %v764
        %v809 = vunpack.c.l.b16 %v765
        %v810 = vunpack.c.h.b16 %v764
        %v811 = vunpack.c.h.b16 %v765
        %v812 = vunpack.c.l.b16 %v766
        %v813 = vunpack.c.l.b16 %v767
        %v814 = vunpack.c.h.b16 %v766
        %v815 = vunpack.c.h.b16 %v767
        %v816 = vpack.c.b16 %v785, %v784
        %v817 = vpack.c.b16 %v787, %v786
        %v818 = vpack.c.b16 %v789, %v788
        %v819 = vpack.c.b16 %v791, %v790
        %v820 = vpack.c.b16 %v793, %v792
        %v821 = vpack.c.b16 %v795, %v794
        %v822 = vpack.c.b16 %v797, %v796
        %v823 = vpack.c.b16 %v799, %v798
        %v824 = vpack.c.b16 %v801, %v800
        %v825 = vpack.c.b16 %v803, %v802
        %v826 = vpack.c.b16 %v805, %v804
        %v827 = vpack.c.b16 %v807, %v806
        %v828 = vpack.c.b16 %v809, %v808
        %v829 = vpack.c.b16 %v811, %v810
        %v830 = vpack.c.b16 %v813, %v812
        %v831 = vpack.c.b16 %v815, %v814
        %848 = vst [vmem:[#allocation3] sm:$0xff] %v816
        %849 = vst [vmem:[#allocation3 + $0x8] sm:$0xff] %v817
        %850 = vst [vmem:[#allocation3 + $0x10] sm:$0xff] %v818
        %851 = vst [vmem:[#allocation3 + $0x18] sm:$0xff] %v819
        %852 = vst [vmem:[#allocation3 + $0x20] sm:$0xff] %v820
        %853 = vst [vmem:[#allocation3 + $0x28] sm:$0xff] %v821
        %854 = vst [vmem:[#allocation3 + $0x30] sm:$0xff] %v822
        %855 = vst [vmem:[#allocation3 + $0x38] sm:$0xff] %v823
        %856 = vst [vmem:[#allocation3 + $0x40] sm:$0xff] %v824
        %857 = vst [vmem:[#allocation3 + $0x48] sm:$0xff] %v825
        %858 = vst [vmem:[#allocation3 + $0x50] sm:$0xff] %v826
        %859 = vst [vmem:[#allocation3 + $0x58] sm:$0xff] %v827
        %860 = vst [vmem:[#allocation3 + $0x60] sm:$0xff] %v828
        %861 = vst [vmem:[#allocation3 + $0x68] sm:$0xff] %v829
        %862 = vst [vmem:[#allocation3 + $0x70] sm:$0xff] %v830
        %863 = vst [vmem:[#allocation3 + $0x78] sm:$0xff] %v831
      $region40: #{attention_forward.1} parent=35 // pred_fallthru
        _
      %s864 = smul.u32 %s20, 128
      %s865 = sshra.s32 %s864, 7
      %s866 = sand.u32 %s864, 127
      %s867 = smul.addr %s865, 4
      %s868 = scalar_lea.vmem %s209, %s867
      %v869 = vld [vmem:[%s868] sm:$0xf]
      %v870 = vpack.c.bf16 %v869, %v869
      %v887 = vunpack.c.l.b16 %v220
      %v888 = vunpack.c.l.b16 %v221
      %v889 = vunpack.c.l.b16 %v222
      %v890 = vunpack.c.l.b16 %v223
      %v891 = vunpack.c.l.b16 %v224
      %v892 = vunpack.c.l.b16 %v225
      %v893 = vunpack.c.l.b16 %v226
      %v894 = vunpack.c.l.b16 %v227
      %v895 = vunpack.c.l.b16 %v228
      %v896 = vunpack.c.l.b16 %v229
      %v897 = vunpack.c.l.b16 %v230
      %v898 = vunpack.c.l.b16 %v231
      %v899 = vunpack.c.l.b16 %v232
      %v900 = vunpack.c.l.b16 %v233
      %v901 = vunpack.c.l.b16 %v234
      %v902 = vunpack.c.l.b16 %v235
      %v903 = vpack.c.b16 %v888, %v887
      %v904 = vpack.c.b16 %v890, %v889
      %v905 = vpack.c.b16 %v892, %v891
      %v906 = vpack.c.b16 %v894, %v893
      %v907 = vpack.c.b16 %v896, %v895
      %v908 = vpack.c.b16 %v898, %v897
      %v909 = vpack.c.b16 %v900, %v899
      %v910 = vpack.c.b16 %v902, %v901
      %vm911 = vcmask 31744
      %v913 = vsel %vm911, %v903, 0
      %v916 = vsel %vm911, %v904, 0
      %v919 = vsel %vm911, %v905, 0
      %v922 = vsel %vm911, %v906, 0
      %v925 = vsel %vm911, %v907, 0
      %v928 = vsel %vm911, %v908, 0
      %v931 = vsel %vm911, %v909, 0
      %v934 = vsel %vm911, %v910, 0
      %vm936 = vcmask 1041408
      %v938 = vsel %vm936, %v870, 0
      %940 = vmatprep.subr.bf16.mxu0 0
      %941 = vmatpush1.bf16.msra.mxu0 0
      %942 = vmatprep.subr.bf16.mxu0 0
      %943 = vmatpush1.bf16.msra.mxu0 0
      %944 = vmatprep.subr.bf16.mxu0 0
      %945 = vmatpush1.bf16.msra.mxu0 0
      %946 = vmatprep.subr.bf16.mxu0 0
      %947 = vmatpush1.bf16.msra.mxu0 0
      %948 = vmatprep.subr.bf16.mxu0 0
      %949 = vmatpush1.bf16.msra.mxu0 0
      %950 = vmatprep.subr.bf16.mxu0 0
      %951 = vmatpush1.bf16.msra.mxu0 0
      %952 = vmatprep.subr.bf16.mxu0 0
      %953 = vmatpush1.bf16.msra.mxu0 0
      %954 = vmatprep.subr.bf16.mxu0 0
      %955 = vmatpush1.bf16.msra.mxu0 %v938
      %956 = vmatprep.subr.bf16.mxu0 0
      %957 = vmatpush2.bf16.msra.mxu0 0
      %958 = vmatprep.subr.bf16.mxu0 0
      %959 = vmatpush2.bf16.msra.mxu0 0
      %960 = vmatprep.subr.bf16.mxu0 0
      %961 = vmatpush2.bf16.msra.mxu0 0
      %962 = vmatprep.subr.bf16.mxu0 0
      %963 = vmatpush2.bf16.msra.mxu0 0
      %964 = vmatprep.subr.bf16.mxu0 0
      %965 = vmatpush2.bf16.msra.mxu0 0
      %966 = vmatprep.subr.bf16.mxu0 0
      %967 = vmatpush2.bf16.msra.mxu0 0
      %968 = vmatprep.subr.bf16.mxu0 0
      %969 = vmatpush2.bf16.msra.mxu0 0
      %970 = vmatprep.subr.bf16.mxu0 0
      %971 = vmatpush2.bf16.msra.mxu0 0
      %972 = vmatprep.mubr.bf16.mxu0 0
      %973 = vmatmul.mubr.bf16.gmra.mxu0 %v913
      %v974 = vpop.f32.mrf.mxu0
      %v975 = vadd.f32 0.0, %v974
      %v976 = vpop.f32.mrf.mxu0
      %v977 = vpop.f32.mrf.mxu0
      %v978 = vadd.f32 0.0, %v977
      %v979 = vpop.f32.mrf.mxu0
      %980 = vmatprep.mubr.bf16.mxu0 0
      %981 = vmatmul.mubr.bf16.gmra.mxu0 %v916
      %v982 = vpop.f32.mrf.mxu0
      %v983 = vadd.f32 0.0, %v982
      %v984 = vpop.f32.mrf.mxu0
      %v985 = vpop.f32.mrf.mxu0
      %v986 = vadd.f32 0.0, %v985
      %v987 = vpop.f32.mrf.mxu0
      %988 = vmatprep.mubr.bf16.mxu0 0
      %989 = vmatmul.mubr.bf16.gmra.mxu0 %v919
      %v990 = vpop.f32.mrf.mxu0
      %v991 = vadd.f32 0.0, %v990
      %v992 = vpop.f32.mrf.mxu0
      %v993 = vpop.f32.mrf.mxu0
      %v994 = vadd.f32 0.0, %v993
      %v995 = vpop.f32.mrf.mxu0
      %996 = vmatprep.mubr.bf16.mxu0 0
      %997 = vmatmul.mubr.bf16.gmra.mxu0 %v922
      %v998 = vpop.f32.mrf.mxu0
      %v999 = vadd.f32 0.0, %v998
      %v1000 = vpop.f32.mrf.mxu0
      %v1001 = vpop.f32.mrf.mxu0
      %v1002 = vadd.f32 0.0, %v1001
      %v1003 = vpop.f32.mrf.mxu0
      %1004 = vmatprep.mubr.bf16.mxu0 0
      %1005 = vmatmul.mubr.bf16.gmra.mxu0 %v925
      %v1006 = vpop.f32.mrf.mxu0
      %v1007 = vadd.f32 0.0, %v1006
      %v1008 = vpop.f32.mrf.mxu0
      %v1009 = vpop.f32.mrf.mxu0
      %v1010 = vadd.f32 0.0, %v1009
      %v1011 = vpop.f32.mrf.mxu0
      %1012 = vmatprep.mubr.bf16.mxu0 0
      %1013 = vmatmul.mubr.bf16.gmra.mxu0 %v928
      %v1014 = vpop.f32.mrf.mxu0
      %v1015 = vadd.f32 0.0, %v1014
      %v1016 = vpop.f32.mrf.mxu0
      %v1017 = vpop.f32.mrf.mxu0
      %v1018 = vadd.f32 0.0, %v1017
      %v1019 = vpop.f32.mrf.mxu0
      %1020 = vmatprep.mubr.bf16.mxu0 0
      %1021 = vmatmul.mubr.bf16.gmra.mxu0 %v931
      %v1022 = vpop.f32.mrf.mxu0
      %v1023 = vadd.f32 0.0, %v1022
      %v1024 = vpop.f32.mrf.mxu0
      %v1025 = vpop.f32.mrf.mxu0
      %v1026 = vadd.f32 0.0, %v1025
      %v1027 = vpop.f32.mrf.mxu0
      %1028 = vmatprep.mubr.bf16.mxu0 0
      %1029 = vmatmul.mubr.bf16.gmra.mxu0 %v934
      %v1030 = vpop.f32.mrf.mxu0
      %v1031 = vadd.f32 0.0, %v1030
      %v1032 = vpop.f32.mrf.mxu0
      %v1033 = vpop.f32.mrf.mxu0
      %v1034 = vadd.f32 0.0, %v1033
      %v1035 = vpop.f32.mrf.mxu0
      %1036 = vdwg.mxu0
      %v1037 = vpack.c.bf16 %v978, %v975
      %v1038 = vpack.c.bf16 %v986, %v983
      %v1039 = vpack.c.bf16 %v994, %v991
      %v1040 = vpack.c.bf16 %v1002, %v999
      %v1041 = vpack.c.bf16 %v1010, %v1007
      %v1042 = vpack.c.bf16 %v1018, %v1015
      %v1043 = vpack.c.bf16 %v1026, %v1023
      %v1044 = vpack.c.bf16 %v1034, %v1031
      %v1045 = vld [vmem:[#allocation2] sm:$0xff]
      %v1046 = vld [vmem:[#allocation2 + $0x8] sm:$0xff]
      %v1047 = vld [vmem:[#allocation2 + $0x10] sm:$0xff]
      %v1048 = vld [vmem:[#allocation2 + $0x18] sm:$0xff]
      %v1049 = vld [vmem:[#allocation3] sm:$0xff]
      %v1050 = vld [vmem:[#allocation3 + $0x8] sm:$0xff]
      %v1051 = vld [vmem:[#allocation3 + $0x10] sm:$0xff]
      %v1052 = vld [vmem:[#allocation3 + $0x18] sm:$0xff]
      %1053 = vxpose.xlu0.c.b16.start [1/8] %v1037, 128
      %1054 = vxpose.xlu0.c.b16.cont [2/8] %v1038, 128
      %1055 = vxpose.xlu0.c.b16.cont [3/8] 0, 128
      %1056 = vxpose.xlu0.c.b16.cont [4/8] 0, 128
      %1057 = vxpose.xlu0.c.b16.cont [5/8] 0, 128
      %1058 = vxpose.xlu0.c.b16.cont [6/8] 0, 128
      %1059 = vxpose.xlu0.c.b16.cont [7/8] 0, 128
      %1060 = vxpose.xlu0.c.b16.end [8/8] 0, 128
      %v1061 = vpop.trf.xlu0
      %v1062 = vpop.trf.xlu0
      %v1063 = vpop.trf.xlu0
      %v1064 = vpop.trf.xlu0
      %v1065 = vpop.trf.xlu0
      %v1066 = vpop.trf.xlu0
      %v1067 = vpop.trf.xlu0
      %v1068 = vpop.trf.xlu0
      %v1073 = vunpack.c.l.b16 %v1045
      %v1074 = vunpack.c.h.b16 %v1045
      %v1075 = vunpack.c.l.b16 %v1046
      %v1076 = vunpack.c.h.b16 %v1046
      %v1077 = vunpack.c.l.b16 %v1047
      %v1078 = vunpack.c.h.b16 %v1047
      %v1079 = vunpack.c.l.b16 %v1048
      %v1080 = vunpack.c.h.b16 %v1048
      %v1081 = vpack.c.b16 %v1075, %v1073
      %v1082 = vpack.c.b16 %v1076, %v1074
      %v1083 = vpack.c.b16 %v1079, %v1077
      %v1084 = vpack.c.b16 %v1080, %v1078
      %vm1089 = vcmask 261120
      %v1091 = vsel %vm1089, %v1061, 0
      %v1094 = vsel %vm1089, %v1062, 0
      %v1097 = vsel %vm1089, %v1063, 0
      %v1100 = vsel %vm1089, %v1064, 0
      %v1103 = vsel %vm1089, %v1065, 0
      %v1106 = vsel %vm1089, %v1066, 0
      %v1109 = vsel %vm1089, %v1067, 0
      %v1112 = vsel %vm1089, %v1068, 0
      %1114 = vmatprep.subr.bf16.mxu0 0
      %1115 = vmatpush1.bf16.msra.mxu0 0
      %1116 = vmatprep.subr.bf16.mxu0 0
      %1117 = vmatpush1.bf16.msra.mxu0 0
      %1118 = vmatprep.subr.bf16.mxu0 0
      %1119 = vmatpush1.bf16.msra.mxu0 0
      %1120 = vmatprep.subr.bf16.mxu0 0
      %1121 = vmatpush1.bf16.msra.mxu0 0
      %1122 = vmatprep.subr.bf16.mxu0 0
      %1123 = vmatpush1.bf16.msra.mxu0 0
      %1124 = vmatprep.subr.bf16.mxu0 0
      %1125 = vmatpush1.bf16.msra.mxu0 0
      %1126 = vmatprep.subr.bf16.mxu0 %v1084
      %1127 = vmatpush1.bf16.msra.mxu0 %v1083
      %1128 = vmatprep.subr.bf16.mxu0 %v1082
      %1129 = vmatpush1.bf16.msra.mxu0 %v1081
      %1130 = vmatprep.subr.bf16.mxu0 0
      %1131 = vmatpush2.bf16.msra.mxu0 0
      %1132 = vmatprep.subr.bf16.mxu0 0
      %1133 = vmatpush2.bf16.msra.mxu0 0
      %1134 = vmatprep.subr.bf16.mxu0 0
      %1135 = vmatpush2.bf16.msra.mxu0 0
      %1136 = vmatprep.subr.bf16.mxu0 0
      %1137 = vmatpush2.bf16.msra.mxu0 0
      %1138 = vmatprep.subr.bf16.mxu0 0
      %1139 = vmatpush2.bf16.msra.mxu0 0
      %1140 = vmatprep.subr.bf16.mxu0 0
      %1141 = vmatpush2.bf16.msra.mxu0 0
      %1142 = vmatprep.subr.bf16.mxu0 0
      %1143 = vmatpush2.bf16.msra.mxu0 0
      %1144 = vmatprep.subr.bf16.mxu0 0
      %1145 = vmatpush2.bf16.msra.mxu0 0
      %1146 = vmatprep.mubr.bf16.mxu0 0
      %1147 = vmatmul.mubr.bf16.gmra.mxu0 %v1091
      %v1148 = vpop.f32.mrf.mxu0
      %v1149 = vadd.f32 0.0, %v1148
      %v1150 = vpop.f32.mrf.mxu0
      %v1151 = vadd.f32 0.0, %v1150
      %v1152 = vpop.f32.mrf.mxu0
      %v1153 = vadd.f32 0.0, %v1152
      %v1154 = vpop.f32.mrf.mxu0
      %v1155 = vadd.f32 0.0, %v1154
      %1156 = vmatprep.mubr.bf16.mxu0 0
      %1157 = vmatmul.mubr.bf16.gmra.mxu0 %v1094
      %v1158 = vpop.f32.mrf.mxu0
      %v1159 = vadd.f32 0.0, %v1158
      %v1160 = vpop.f32.mrf.mxu0
      %v1161 = vadd.f32 0.0, %v1160
      %v1162 = vpop.f32.mrf.mxu0
      %v1163 = vadd.f32 0.0, %v1162
      %v1164 = vpop.f32.mrf.mxu0
      %v1165 = vadd.f32 0.0, %v1164
      %1166 = vmatprep.mubr.bf16.mxu0 0
      %1167 = vmatmul.mubr.bf16.gmra.mxu0 %v1097
      %v1168 = vpop.f32.mrf.mxu0
      %v1169 = vadd.f32 0.0, %v1168
      %v1170 = vpop.f32.mrf.mxu0
      %v1171 = vadd.f32 0.0, %v1170
      %v1172 = vpop.f32.mrf.mxu0
      %v1173 = vadd.f32 0.0, %v1172
      %v1174 = vpop.f32.mrf.mxu0
      %v1175 = vadd.f32 0.0, %v1174
      %1176 = vmatprep.mubr.bf16.mxu0 0
      %1177 = vmatmul.mubr.bf16.gmra.mxu0 %v1100
      %v1178 = vpop.f32.mrf.mxu0
      %v1179 = vadd.f32 0.0, %v1178
      %v1180 = vpop.f32.mrf.mxu0
      %v1181 = vadd.f32 0.0, %v1180
      %v1182 = vpop.f32.mrf.mxu0
      %v1183 = vadd.f32 0.0, %v1182
      %v1184 = vpop.f32.mrf.mxu0
      %v1185 = vadd.f32 0.0, %v1184
      %1186 = vmatprep.mubr.bf16.mxu0 0
      %1187 = vmatmul.mubr.bf16.gmra.mxu0 %v1103
      %v1188 = vpop.f32.mrf.mxu0
      %v1189 = vadd.f32 0.0, %v1188
      %v1190 = vpop.f32.mrf.mxu0
      %v1191 = vadd.f32 0.0, %v1190
      %v1192 = vpop.f32.mrf.mxu0
      %v1193 = vadd.f32 0.0, %v1192
      %v1194 = vpop.f32.mrf.mxu0
      %v1195 = vadd.f32 0.0, %v1194
      %1196 = vmatprep.mubr.bf16.mxu0 0
      %1197 = vmatmul.mubr.bf16.gmra.mxu0 %v1106
      %v1198 = vpop.f32.mrf.mxu0
      %v1199 = vadd.f32 0.0, %v1198
      %v1200 = vpop.f32.mrf.mxu0
      %v1201 = vadd.f32 0.0, %v1200
      %v1202 = vpop.f32.mrf.mxu0
      %v1203 = vadd.f32 0.0, %v1202
      %v1204 = vpop.f32.mrf.mxu0
      %v1205 = vadd.f32 0.0, %v1204
      %1206 = vmatprep.mubr.bf16.mxu0 0
      %1207 = vmatmul.mubr.bf16.gmra.mxu0 %v1109
      %v1208 = vpop.f32.mrf.mxu0
      %v1209 = vadd.f32 0.0, %v1208
      %v1210 = vpop.f32.mrf.mxu0
      %v1211 = vadd.f32 0.0, %v1210
      %v1212 = vpop.f32.mrf.mxu0
      %v1213 = vadd.f32 0.0, %v1212
      %v1214 = vpop.f32.mrf.mxu0
      %v1215 = vadd.f32 0.0, %v1214
      %1216 = vmatprep.mubr.bf16.mxu0 0
      %1217 = vmatmul.mubr.bf16.gmra.mxu0 %v1112
      %v1218 = vpop.f32.mrf.mxu0
      %v1219 = vadd.f32 0.0, %v1218
      %v1220 = vpop.f32.mrf.mxu0
      %v1221 = vadd.f32 0.0, %v1220
      %v1222 = vpop.f32.mrf.mxu0
      %v1223 = vadd.f32 0.0, %v1222
      %v1224 = vpop.f32.mrf.mxu0
      %v1225 = vadd.f32 0.0, %v1224
      %1226 = vdwg.mxu0
      %v1227 = vmax.f32 %v1149, %v1151
      %1228 = vmax.xlane.f32.xlu0 %v1227
      %v1229 = vpop.xlane.xlu0 %1228
      %v1230 = vmax.f32 %v1153, %v1155
      %1231 = vmax.xlane.f32.xlu0 %v1230
      %v1232 = vpop.xlane.xlu0 %1231
      %v1233 = vmax.f32 %v1159, %v1161
      %1234 = vmax.xlane.f32.xlu0 %v1233
      %v1235 = vpop.xlane.xlu0 %1234
      %v1236 = vmax.f32 %v1163, %v1165
      %1237 = vmax.xlane.f32.xlu0 %v1236
      %v1238 = vpop.xlane.xlu0 %1237
      %v1239 = vmax.f32 %v1169, %v1171
      %1240 = vmax.xlane.f32.xlu0 %v1239
      %v1241 = vpop.xlane.xlu0 %1240
      %v1242 = vmax.f32 %v1173, %v1175
      %1243 = vmax.xlane.f32.xlu0 %v1242
      %v1244 = vpop.xlane.xlu0 %1243
      %v1245 = vmax.f32 %v1179, %v1181
      %1246 = vmax.xlane.f32.xlu0 %v1245
      %v1247 = vpop.xlane.xlu0 %1246
      %v1248 = vmax.f32 %v1183, %v1185
      %1249 = vmax.xlane.f32.xlu0 %v1248
      %v1250 = vpop.xlane.xlu0 %1249
      %v1251 = vmax.f32 %v1189, %v1191
      %1252 = vmax.xlane.f32.xlu0 %v1251
      %v1253 = vpop.xlane.xlu0 %1252
      %v1254 = vmax.f32 %v1193, %v1195
      %1255 = vmax.xlane.f32.xlu0 %v1254
      %v1256 = vpop.xlane.xlu0 %1255
      %v1257 = vmax.f32 %v1199, %v1201
      %1258 = vmax.xlane.f32.xlu0 %v1257
      %v1259 = vpop.xlane.xlu0 %1258
      %v1260 = vmax.f32 %v1203, %v1205
      %1261 = vmax.xlane.f32.xlu0 %v1260
      %v1262 = vpop.xlane.xlu0 %1261
      %v1263 = vmax.f32 %v1209, %v1211
      %1264 = vmax.xlane.f32.xlu0 %v1263
      %v1265 = vpop.xlane.xlu0 %1264
      %v1266 = vmax.f32 %v1213, %v1215
      %1267 = vmax.xlane.f32.xlu0 %v1266
      %v1268 = vpop.xlane.xlu0 %1267
      %v1269 = vmax.f32 %v1219, %v1221
      %1270 = vmax.xlane.f32.xlu0 %v1269
      %v1271 = vpop.xlane.xlu0 %1270
      %v1272 = vmax.f32 %v1223, %v1225
      %1273 = vmax.xlane.f32.xlu0 %v1272
      %v1274 = vpop.xlane.xlu0 %1273
      %v1275 = vsub.f32 %v1149, %v1229
      %v1276 = vsub.f32 %v1151, %v1229
      %v1277 = vsub.f32 %v1153, %v1232
      %v1278 = vsub.f32 %v1155, %v1232
      %v1279 = vsub.f32 %v1159, %v1235
      %v1280 = vsub.f32 %v1161, %v1235
      %v1281 = vsub.f32 %v1163, %v1238
      %v1282 = vsub.f32 %v1165, %v1238
      %v1283 = vsub.f32 %v1169, %v1241
      %v1284 = vsub.f32 %v1171, %v1241
      %v1285 = vsub.f32 %v1173, %v1244
      %v1286 = vsub.f32 %v1175, %v1244
      %v1287 = vsub.f32 %v1179, %v1247
      %v1288 = vsub.f32 %v1181, %v1247
      %v1289 = vsub.f32 %v1183, %v1250
      %v1290 = vsub.f32 %v1185, %v1250
      %v1291 = vsub.f32 %v1189, %v1253
      %v1292 = vsub.f32 %v1191, %v1253
      %v1293 = vsub.f32 %v1193, %v1256
      %v1294 = vsub.f32 %v1195, %v1256
      %v1295 = vsub.f32 %v1199, %v1259
      %v1296 = vsub.f32 %v1201, %v1259
      %v1297 = vsub.f32 %v1203, %v1262
      %v1298 = vsub.f32 %v1205, %v1262
      %v1299 = vsub.f32 %v1209, %v1265
      %v1300 = vsub.f32 %v1211, %v1265
      %v1301 = vsub.f32 %v1213, %v1268
      %v1302 = vsub.f32 %v1215, %v1268
      %v1303 = vsub.f32 %v1219, %v1271
      %v1304 = vsub.f32 %v1221, %v1271
      %v1305 = vsub.f32 %v1223, %v1274
      %v1306 = vsub.f32 %v1225, %v1274
      %v1307 = vmul.f32 %v1275, 1.442695
      %v1308 = vpow.pop %v1307
      %v1309 = vmul.f32 %v1276, 1.442695
      %v1310 = vpow.pop %v1309
      %v1311 = vmul.f32 %v1277, 1.442695
      %v1312 = vpow.pop %v1311
      %v1313 = vmul.f32 %v1278, 1.442695
      %v1314 = vpow.pop %v1313
      %v1315 = vmul.f32 %v1279, 1.442695
      %v1316 = vpow.pop %v1315
      %v1317 = vmul.f32 %v1280, 1.442695
      %v1318 = vpow.pop %v1317
      %v1319 = vmul.f32 %v1281, 1.442695
      %v1320 = vpow.pop %v1319
      %v1321 = vmul.f32 %v1282, 1.442695
      %v1322 = vpow.pop %v1321
      %v1323 = vmul.f32 %v1283, 1.442695
      %v1324 = vpow.pop %v1323
      %v1325 = vmul.f32 %v1284, 1.442695
      %v1326 = vpow.pop %v1325
      %v1327 = vmul.f32 %v1285, 1.442695
      %v1328 = vpow.pop %v1327
      %v1329 = vmul.f32 %v1286, 1.442695
      %v1330 = vpow.pop %v1329
      %v1331 = vmul.f32 %v1287, 1.442695
      %v1332 = vpow.pop %v1331
      %v1333 = vmul.f32 %v1288, 1.442695
      %v1334 = vpow.pop %v1333
      %v1335 = vmul.f32 %v1289, 1.442695
      %v1336 = vpow.pop %v1335
      %v1337 = vmul.f32 %v1290, 1.442695
      %v1338 = vpow.pop %v1337
      %v1339 = vmul.f32 %v1291, 1.442695
      %v1340 = vpow.pop %v1339
      %v1341 = vmul.f32 %v1292, 1.442695
      %v1342 = vpow.pop %v1341
      %v1343 = vmul.f32 %v1293, 1.442695
      %v1344 = vpow.pop %v1343
      %v1345 = vmul.f32 %v1294, 1.442695
      %v1346 = vpow.pop %v1345
      %v1347 = vmul.f32 %v1295, 1.442695
      %v1348 = vpow.pop %v1347
      %v1349 = vmul.f32 %v1296, 1.442695
      %v1350 = vpow.pop %v1349
      %v1351 = vmul.f32 %v1297, 1.442695
      %v1352 = vpow.pop %v1351
      %v1353 = vmul.f32 %v1298, 1.442695
      %v1354 = vpow.pop %v1353
      %v1355 = vmul.f32 %v1299, 1.442695
      %v1356 = vpow.pop %v1355
      %v1357 = vmul.f32 %v1300, 1.442695
      %v1358 = vpow.pop %v1357
      %v1359 = vmul.f32 %v1301, 1.442695
      %v1360 = vpow.pop %v1359
      %v1361 = vmul.f32 %v1302, 1.442695
      %v1362 = vpow.pop %v1361
      %v1363 = vmul.f32 %v1303, 1.442695
      %v1364 = vpow.pop %v1363
      %v1365 = vmul.f32 %v1304, 1.442695
      %v1366 = vpow.pop %v1365
      %v1367 = vmul.f32 %v1305, 1.442695
      %v1368 = vpow.pop %v1367
      %v1369 = vmul.f32 %v1306, 1.442695
      %v1370 = vpow.pop %v1369
      %v1371 = vpack.c.bf16 %v1312, %v1308
      %v1372 = vpack.c.bf16 %v1314, %v1310
      %v1373 = vpack.c.bf16 %v1320, %v1316
      %v1374 = vpack.c.bf16 %v1322, %v1318
      %v1375 = vpack.c.bf16 %v1328, %v1324
      %v1376 = vpack.c.bf16 %v1330, %v1326
      %v1377 = vpack.c.bf16 %v1336, %v1332
      %v1378 = vpack.c.bf16 %v1338, %v1334
      %v1379 = vpack.c.bf16 %v1344, %v1340
      %v1380 = vpack.c.bf16 %v1346, %v1342
      %v1381 = vpack.c.bf16 %v1352, %v1348
      %v1382 = vpack.c.bf16 %v1354, %v1350
      %v1383 = vpack.c.bf16 %v1360, %v1356
      %v1384 = vpack.c.bf16 %v1362, %v1358
      %v1385 = vpack.c.bf16 %v1368, %v1364
      %v1386 = vpack.c.bf16 %v1370, %v1366
      %v1391 = vunpack.c.l.b16 %v1049
      %v1392 = vunpack.c.h.b16 %v1049
      %v1393 = vunpack.c.l.b16 %v1050
      %v1394 = vunpack.c.h.b16 %v1050
      %v1395 = vunpack.c.l.b16 %v1051
      %v1396 = vunpack.c.h.b16 %v1051
      %v1397 = vunpack.c.l.b16 %v1052
      %v1398 = vunpack.c.h.b16 %v1052
      %v1399 = vpack.c.b16 %v1393, %v1391
      %v1400 = vpack.c.b16 %v1394, %v1392
      %v1401 = vpack.c.b16 %v1397, %v1395
      %v1402 = vpack.c.b16 %v1398, %v1396
      %1407 = vmatprep.subr.bf16.mxu0 %v1386
      %1408 = vmatpush1.bf16.xpose.msra.mxu0 %v1385
      %1409 = vmatprep.subr.bf16.mxu0 %v1384
      %1410 = vmatpush1.bf16.xpose.msra.mxu0 %v1383
      %1411 = vmatprep.subr.bf16.mxu0 %v1382
      %1412 = vmatpush1.bf16.xpose.msra.mxu0 %v1381
      %1413 = vmatprep.subr.bf16.mxu0 %v1380
      %1414 = vmatpush1.bf16.xpose.msra.mxu0 %v1379
      %1415 = vmatprep.subr.bf16.mxu0 %v1378
      %1416 = vmatpush1.bf16.xpose.msra.mxu0 %v1377
      %1417 = vmatprep.subr.bf16.mxu0 %v1376
      %1418 = vmatpush1.bf16.xpose.msra.mxu0 %v1375
      %1419 = vmatprep.subr.bf16.mxu0 %v1374
      %1420 = vmatpush1.bf16.xpose.msra.mxu0 %v1373
      %1421 = vmatprep.subr.bf16.mxu0 %v1372
      %1422 = vmatpush1.bf16.xpose.msra.mxu0 %v1371
      %1423 = vmatprep.subr.bf16.mxu0 0
      %1424 = vmatpush2.bf16.xpose.msra.mxu0 0
      %1425 = vmatprep.subr.bf16.mxu0 0
      %1426 = vmatpush2.bf16.xpose.msra.mxu0 0
      %1427 = vmatprep.subr.bf16.mxu0 0
      %1428 = vmatpush2.bf16.xpose.msra.mxu0 0
      %1429 = vmatprep.subr.bf16.mxu0 0
      %1430 = vmatpush2.bf16.xpose.msra.mxu0 0
      %1431 = vmatprep.subr.bf16.mxu0 0
      %1432 = vmatpush2.bf16.xpose.msra.mxu0 0
      %1433 = vmatprep.subr.bf16.mxu0 0
      %1434 = vmatpush2.bf16.xpose.msra.mxu0 0
      %1435 = vmatprep.subr.bf16.mxu0 0
      %1436 = vmatpush2.bf16.xpose.msra.mxu0 0
      %1437 = vmatprep.subr.bf16.mxu0 0
      %1438 = vmatpush2.bf16.xpose.msra.mxu0 0
      %1439 = vmatprep.mubr.bf16.mxu0 %v1400
      %1440 = vmatmul.mubr.bf16.gmra.mxu0 %v1399
      %v1441 = vpop.f32.mrf.mxu0
      %v1442 = vadd.f32 0.0, %v1441
      %v1443 = vpop.f32.mrf.mxu0
      %v1444 = vpop.f32.mrf.mxu0
      %v1445 = vadd.f32 0.0, %v1444
      %v1446 = vpop.f32.mrf.mxu0
      %1447 = vmatprep.mubr.bf16.mxu0 %v1402
      %1448 = vmatmul.mubr.bf16.gmra.mxu0 %v1401
      %v1449 = vpop.f32.mrf.mxu0
      %v1450 = vadd.f32 0.0, %v1449
      %v1451 = vpop.f32.mrf.mxu0
      %v1452 = vpop.f32.mrf.mxu0
      %v1453 = vadd.f32 0.0, %v1452
      %v1454 = vpop.f32.mrf.mxu0
      %1455 = vdwg.mxu0
      %1456 = vmatprep.subr.bf16.mxu0 %v1386
      %1457 = vmatpush1.bf16.xpose.msra.mxu0 %v1385
      %1458 = vmatprep.subr.bf16.mxu0 %v1384
      %1459 = vmatpush1.bf16.xpose.msra.mxu0 %v1383
      %1460 = vmatprep.subr.bf16.mxu0 %v1382
      %1461 = vmatpush1.bf16.xpose.msra.mxu0 %v1381
      %1462 = vmatprep.subr.bf16.mxu0 %v1380
      %1463 = vmatpush1.bf16.xpose.msra.mxu0 %v1379
      %1464 = vmatprep.subr.bf16.mxu0 %v1378
      %1465 = vmatpush1.bf16.xpose.msra.mxu0 %v1377
      %1466 = vmatprep.subr.bf16.mxu0 %v1376
      %1467 = vmatpush1.bf16.xpose.msra.mxu0 %v1375
      %1468 = vmatprep.subr.bf16.mxu0 %v1374
      %1469 = vmatpush1.bf16.xpose.msra.mxu0 %v1373
      %1470 = vmatprep.subr.bf16.mxu0 %v1372
      %1471 = vmatpush1.bf16.xpose.msra.mxu0 %v1371
      %1472 = vmatprep.subr.bf16.mxu0 0
      %1473 = vmatpush2.bf16.xpose.msra.mxu0 0
      %1474 = vmatprep.subr.bf16.mxu0 0
      %1475 = vmatpush2.bf16.xpose.msra.mxu0 0
      %1476 = vmatprep.subr.bf16.mxu0 0
      %1477 = vmatpush2.bf16.xpose.msra.mxu0 0
      %1478 = vmatprep.subr.bf16.mxu0 0
      %1479 = vmatpush2.bf16.xpose.msra.mxu0 0
      %1480 = vmatprep.subr.bf16.mxu0 0
      %1481 = vmatpush2.bf16.xpose.msra.mxu0 0
      %1482 = vmatprep.subr.bf16.mxu0 0
      %1483 = vmatpush2.bf16.xpose.msra.mxu0 0
      %1484 = vmatprep.subr.bf16.mxu0 0
      %1485 = vmatpush2.bf16.xpose.msra.mxu0 0
      %1486 = vmatprep.subr.bf16.mxu0 0
      %1487 = vmatpush2.bf16.xpose.msra.mxu0 0
      %1488 = vmatprep.mubr.bf16.mxu0 1065369472
      %1489 = vmatmul.mubr.bf16.gmra.mxu0 1065369472
      %v1490 = vpop.f32.mrf.mxu0
      %v1491 = vadd.f32 0.0, %v1490
      %v1492 = vpop.f32.mrf.mxu0
      %v1493 = vpop.f32.mrf.mxu0
      %v1494 = vpop.f32.mrf.mxu0
      %1495 = vdwg.mxu0
      %v1496 = vrcp.pop %v1491
      %v1497 = vlaneseq
      %v1498 = vshrl.u32 %v1497, 7
      %v1499 = vsub.s32 0, %v1498
      %v1500 = vrot.slane %v1496, %v1499
      %v1501 = vmul.f32 %v1442, %v1500
      %v1502 = vmul.f32 %v1445, %v1500
      %v1503 = vmul.f32 %v1450, %v1500
      %v1504 = vmul.f32 %v1453, %v1500
      %1505 = vst [vmem:[#allocation4] sm:$0xff] %v1501
      %1506 = vst [vmem:[#allocation4 + $0x8] sm:$0xff] %v1502
      %1507 = vst [vmem:[#allocation4 + $0x10] sm:$0xff] %v1503
      %1508 = vst [vmem:[#allocation4 + $0x18] sm:$0xff] %v1504
      %v1509 = vld [vmem:[#allocation2 + $0x20] sm:$0xff]
      %v1510 = vld [vmem:[#allocation2 + $0x28] sm:$0xff]
      %v1511 = vld [vmem:[#allocation2 + $0x30] sm:$0xff]
      %v1512 = vld [vmem:[#allocation2 + $0x38] sm:$0xff]
      %v1513 = vld [vmem:[#allocation3 + $0x20] sm:$0xff]
      %v1514 = vld [vmem:[#allocation3 + $0x28] sm:$0xff]
      %v1515 = vld [vmem:[#allocation3 + $0x30] sm:$0xff]
      %v1516 = vld [vmem:[#allocation3 + $0x38] sm:$0xff]
      %1517 = vxpose.xlu0.c.b16.start [1/8] %v1039, 128
      %1518 = vxpose.xlu0.c.b16.cont [2/8] %v1040, 128
      %1519 = vxpose.xlu0.c.b16.cont [3/8] 0, 128
      %1520 = vxpose.xlu0.c.b16.cont [4/8] 0, 128
      %1521 = vxpose.xlu0.c.b16.cont [5/8] 0, 128
      %1522 = vxpose.xlu0.c.b16.cont [6/8] 0, 128
      %1523 = vxpose.xlu0.c.b16.cont [7/8] 0, 128
      %1524 = vxpose.xlu0.c.b16.end [8/8] 0, 128
      %v1525 = vpop.trf.xlu0
      %v1526 = vpop.trf.xlu0
      %v1527 = vpop.trf.xlu0
      %v1528 = vpop.trf.xlu0
      %v1529 = vpop.trf.xlu0
      %v1530 = vpop.trf.xlu0
      %v1531 = vpop.trf.xlu0
      %v1532 = vpop.trf.xlu0
      %v1537 = vunpack.c.l.b16 %v1509
      %v1538 = vunpack.c.h.b16 %v1509
      %v1539 = vunpack.c.l.b16 %v1510
      %v1540 = vunpack.c.h.b16 %v1510
      %v1541 = vunpack.c.l.b16 %v1511
      %v1542 = vunpack.c.h.b16 %v1511
      %v1543 = vunpack.c.l.b16 %v1512
      %v1544 = vunpack.c.h.b16 %v1512
      %v1545 = vpack.c.b16 %v1539, %v1537
      %v1546 = vpack.c.b16 %v1540, %v1538
      %v1547 = vpack.c.b16 %v1543, %v1541
      %v1548 = vpack.c.b16 %v1544, %v1542
      %v1554 = vsel %vm1089, %v1525, 0
      %v1557 = vsel %vm1089, %v1526, 0
      %v1560 = vsel %vm1089, %v1527, 0
      %v1563 = vsel %vm1089, %v1528, 0
      %v1566 = vsel %vm1089, %v1529, 0
      %v1569 = vsel %vm1089, %v1530, 0
      %v1572 = vsel %vm1089, %v1531, 0
      %v1575 = vsel %vm1089, %v1532, 0
      %1577 = vmatprep.subr.bf16.mxu0 0
      %1578 = vmatpush1.bf16.msra.mxu0 0
      %1579 = vmatprep.subr.bf16.mxu0 0
      %1580 = vmatpush1.bf16.msra.mxu0 0
      %1581 = vmatprep.subr.bf16.mxu0 0
      %1582 = vmatpush1.bf16.msra.mxu0 0
      %1583 = vmatprep.subr.bf16.mxu0 0
      %1584 = vmatpush1.bf16.msra.mxu0 0
      %1585 = vmatprep.subr.bf16.mxu0 0
      %1586 = vmatpush1.bf16.msra.mxu0 0
      %1587 = vmatprep.subr.bf16.mxu0 0
      %1588 = vmatpush1.bf16.msra.mxu0 0
      %1589 = vmatprep.subr.bf16.mxu0 %v1548
      %1590 = vmatpush1.bf16.msra.mxu0 %v1547
      %1591 = vmatprep.subr.bf16.mxu0 %v1546
      %1592 = vmatpush1.bf16.msra.mxu0 %v1545
      %1593 = vmatprep.subr.bf16.mxu0 0
      %1594 = vmatpush2.bf16.msra.mxu0 0
      %1595 = vmatprep.subr.bf16.mxu0 0
      %1596 = vmatpush2.bf16.msra.mxu0 0
      %1597 = vmatprep.subr.bf16.mxu0 0
      %1598 = vmatpush2.bf16.msra.mxu0 0
      %1599 = vmatprep.subr.bf16.mxu0 0
      %1600 = vmatpush2.bf16.msra.mxu0 0
      %1601 = vmatprep.subr.bf16.mxu0 0
      %1602 = vmatpush2.bf16.msra.mxu0 0
      %1603 = vmatprep.subr.bf16.mxu0 0
      %1604 = vmatpush2.bf16.msra.mxu0 0
      %1605 = vmatprep.subr.bf16.mxu0 0
      %1606 = vmatpush2.bf16.msra.mxu0 0
      %1607 = vmatprep.subr.bf16.mxu0 0
      %1608 = vmatpush2.bf16.msra.mxu0 0
      %1609 = vmatprep.mubr.bf16.mxu0 0
      %1610 = vmatmul.mubr.bf16.gmra.mxu0 %v1554
      %v1611 = vpop.f32.mrf.mxu0
      %v1612 = vadd.f32 0.0, %v1611
      %v1613 = vpop.f32.mrf.mxu0
      %v1614 = vadd.f32 0.0, %v1613
      %v1615 = vpop.f32.mrf.mxu0
      %v1616 = vadd.f32 0.0, %v1615
      %v1617 = vpop.f32.mrf.mxu0
      %v1618 = vadd.f32 0.0, %v1617
      %1619 = vmatprep.mubr.bf16.mxu0 0
      %1620 = vmatmul.mubr.bf16.gmra.mxu0 %v1557
      %v1621 = vpop.f32.mrf.mxu0
      %v1622 = vadd.f32 0.0, %v1621
      %v1623 = vpop.f32.mrf.mxu0
      %v1624 = vadd.f32 0.0, %v1623
      %v1625 = vpop.f32.mrf.mxu0
      %v1626 = vadd.f32 0.0, %v1625
      %v1627 = vpop.f32.mrf.mxu0
      %v1628 = vadd.f32 0.0, %v1627
      %1629 = vmatprep.mubr.bf16.mxu0 0
      %1630 = vmatmul.mubr.bf16.gmra.mxu0 %v1560
      %v1631 = vpop.f32.mrf.mxu0
      %v1632 = vadd.f32 0.0, %v1631
      %v1633 = vpop.f32.mrf.mxu0
      %v1634 = vadd.f32 0.0, %v1633
      %v1635 = vpop.f32.mrf.mxu0
      %v1636 = vadd.f32 0.0, %v1635
      %v1637 = vpop.f32.mrf.mxu0
      %v1638 = vadd.f32 0.0, %v1637
      %1639 = vmatprep.mubr.bf16.mxu0 0
      %1640 = vmatmul.mubr.bf16.gmra.mxu0 %v1563
      %v1641 = vpop.f32.mrf.mxu0
      %v1642 = vadd.f32 0.0, %v1641
      %v1643 = vpop.f32.mrf.mxu0
      %v1644 = vadd.f32 0.0, %v1643
      %v1645 = vpop.f32.mrf.mxu0
      %v1646 = vadd.f32 0.0, %v1645
      %v1647 = vpop.f32.mrf.mxu0
      %v1648 = vadd.f32 0.0, %v1647
      %1649 = vmatprep.mubr.bf16.mxu0 0
      %1650 = vmatmul.mubr.bf16.gmra.mxu0 %v1566
      %v1651 = vpop.f32.mrf.mxu0
      %v1652 = vadd.f32 0.0, %v1651
      %v1653 = vpop.f32.mrf.mxu0
      %v1654 = vadd.f32 0.0, %v1653
      %v1655 = vpop.f32.mrf.mxu0
      %v1656 = vadd.f32 0.0, %v1655
      %v1657 = vpop.f32.mrf.mxu0
      %v1658 = vadd.f32 0.0, %v1657
      %1659 = vmatprep.mubr.bf16.mxu0 0
      %1660 = vmatmul.mubr.bf16.gmra.mxu0 %v1569
      %v1661 = vpop.f32.mrf.mxu0
      %v1662 = vadd.f32 0.0, %v1661
      %v1663 = vpop.f32.mrf.mxu0
      %v1664 = vadd.f32 0.0, %v1663
      %v1665 = vpop.f32.mrf.mxu0
      %v1666 = vadd.f32 0.0, %v1665
      %v1667 = vpop.f32.mrf.mxu0
      %v1668 = vadd.f32 0.0, %v1667
      %1669 = vmatprep.mubr.bf16.mxu0 0
      %1670 = vmatmul.mubr.bf16.gmra.mxu0 %v1572
      %v1671 = vpop.f32.mrf.mxu0
      %v1672 = vadd.f32 0.0, %v1671
      %v1673 = vpop.f32.mrf.mxu0
      %v1674 = vadd.f32 0.0, %v1673
      %v1675 = vpop.f32.mrf.mxu0
      %v1676 = vadd.f32 0.0, %v1675
      %v1677 = vpop.f32.mrf.mxu0
      %v1678 = vadd.f32 0.0, %v1677
      %1679 = vmatprep.mubr.bf16.mxu0 0
      %1680 = vmatmul.mubr.bf16.gmra.mxu0 %v1575
      %v1681 = vpop.f32.mrf.mxu0
      %v1682 = vadd.f32 0.0, %v1681
      %v1683 = vpop.f32.mrf.mxu0
      %v1684 = vadd.f32 0.0, %v1683
      %v1685 = vpop.f32.mrf.mxu0
      %v1686 = vadd.f32 0.0, %v1685
      %v1687 = vpop.f32.mrf.mxu0
      %v1688 = vadd.f32 0.0, %v1687
      %1689 = vdwg.mxu0
      %v1690 = vmax.f32 %v1612, %v1614
      %1691 = vmax.xlane.f32.xlu0 %v1690
      %v1692 = vpop.xlane.xlu0 %1691
      %v1693 = vmax.f32 %v1616, %v1618
      %1694 = vmax.xlane.f32.xlu0 %v1693
      %v1695 = vpop.xlane.xlu0 %1694
      %v1696 = vmax.f32 %v1622, %v1624
      %1697 = vmax.xlane.f32.xlu0 %v1696
      %v1698 = vpop.xlane.xlu0 %1697
      %v1699 = vmax.f32 %v1626, %v1628
      %1700 = vmax.xlane.f32.xlu0 %v1699
      %v1701 = vpop.xlane.xlu0 %1700
      %v1702 = vmax.f32 %v1632, %v1634
      %1703 = vmax.xlane.f32.xlu0 %v1702
      %v1704 = vpop.xlane.xlu0 %1703
      %v1705 = vmax.f32 %v1636, %v1638
      %1706 = vmax.xlane.f32.xlu0 %v1705
      %v1707 = vpop.xlane.xlu0 %1706
      %v1708 = vmax.f32 %v1642, %v1644
      %1709 = vmax.xlane.f32.xlu0 %v1708
      %v1710 = vpop.xlane.xlu0 %1709
      %v1711 = vmax.f32 %v1646, %v1648
      %1712 = vmax.xlane.f32.xlu0 %v1711
      %v1713 = vpop.xlane.xlu0 %1712
      %v1714 = vmax.f32 %v1652, %v1654
      %1715 = vmax.xlane.f32.xlu0 %v1714
      %v1716 = vpop.xlane.xlu0 %1715
      %v1717 = vmax.f32 %v1656, %v1658
      %1718 = vmax.xlane.f32.xlu0 %v1717
      %v1719 = vpop.xlane.xlu0 %1718
      %v1720 = vmax.f32 %v1662, %v1664
      %1721 = vmax.xlane.f32.xlu0 %v1720
      %v1722 = vpop.xlane.xlu0 %1721
      %v1723 = vmax.f32 %v1666, %v1668
      %1724 = vmax.xlane.f32.xlu0 %v1723
      %v1725 = vpop.xlane.xlu0 %1724
      %v1726 = vmax.f32 %v1672, %v1674
      %1727 = vmax.xlane.f32.xlu0 %v1726
      %v1728 = vpop.xlane.xlu0 %1727
      %v1729 = vmax.f32 %v1676, %v1678
      %1730 = vmax.xlane.f32.xlu0 %v1729
      %v1731 = vpop.xlane.xlu0 %1730
      %v1732 = vmax.f32 %v1682, %v1684
      %1733 = vmax.xlane.f32.xlu0 %v1732
      %v1734 = vpop.xlane.xlu0 %1733
      %v1735 = vmax.f32 %v1686, %v1688
      %1736 = vmax.xlane.f32.xlu0 %v1735
      %v1737 = vpop.xlane.xlu0 %1736
      %v1738 = vsub.f32 %v1612, %v1692
      %v1739 = vsub.f32 %v1614, %v1692
      %v1740 = vsub.f32 %v1616, %v1695
      %v1741 = vsub.f32 %v1618, %v1695
      %v1742 = vsub.f32 %v1622, %v1698
      %v1743 = vsub.f32 %v1624, %v1698
      %v1744 = vsub.f32 %v1626, %v1701
      %v1745 = vsub.f32 %v1628, %v1701
      %v1746 = vsub.f32 %v1632, %v1704
      %v1747 = vsub.f32 %v1634, %v1704
      %v1748 = vsub.f32 %v1636, %v1707
      %v1749 = vsub.f32 %v1638, %v1707
      %v1750 = vsub.f32 %v1642, %v1710
      %v1751 = vsub.f32 %v1644, %v1710
      %v1752 = vsub.f32 %v1646, %v1713
      %v1753 = vsub.f32 %v1648, %v1713
      %v1754 = vsub.f32 %v1652, %v1716
      %v1755 = vsub.f32 %v1654, %v1716
      %v1756 = vsub.f32 %v1656, %v1719
      %v1757 = vsub.f32 %v1658, %v1719
      %v1758 = vsub.f32 %v1662, %v1722
      %v1759 = vsub.f32 %v1664, %v1722
      %v1760 = vsub.f32 %v1666, %v1725
      %v1761 = vsub.f32 %v1668, %v1725
      %v1762 = vsub.f32 %v1672, %v1728
      %v1763 = vsub.f32 %v1674, %v1728
      %v1764 = vsub.f32 %v1676, %v1731
      %v1765 = vsub.f32 %v1678, %v1731
      %v1766 = vsub.f32 %v1682, %v1734
      %v1767 = vsub.f32 %v1684, %v1734
      %v1768 = vsub.f32 %v1686, %v1737
      %v1769 = vsub.f32 %v1688, %v1737
      %v1770 = vmul.f32 %v1738, 1.442695
      %v1771 = vpow.pop %v1770
      %v1772 = vmul.f32 %v1739, 1.442695
      %v1773 = vpow.pop %v1772
      %v1774 = vmul.f32 %v1740, 1.442695
      %v1775 = vpow.pop %v1774
      %v1776 = vmul.f32 %v1741, 1.442695
      %v1777 = vpow.pop %v1776
      %v1778 = vmul.f32 %v1742, 1.442695
      %v1779 = vpow.pop %v1778
      %v1780 = vmul.f32 %v1743, 1.442695
      %v1781 = vpow.pop %v1780
      %v1782 = vmul.f32 %v1744, 1.442695
      %v1783 = vpow.pop %v1782
      %v1784 = vmul.f32 %v1745, 1.442695
      %v1785 = vpow.pop %v1784
      %v1786 = vmul.f32 %v1746, 1.442695
      %v1787 = vpow.pop %v1786
      %v1788 = vmul.f32 %v1747, 1.442695
      %v1789 = vpow.pop %v1788
      %v1790 = vmul.f32 %v1748, 1.442695
      %v1791 = vpow.pop %v1790
      %v1792 = vmul.f32 %v1749, 1.442695
      %v1793 = vpow.pop %v1792
      %v1794 = vmul.f32 %v1750, 1.442695
      %v1795 = vpow.pop %v1794
      %v1796 = vmul.f32 %v1751, 1.442695
      %v1797 = vpow.pop %v1796
      %v1798 = vmul.f32 %v1752, 1.442695
      %v1799 = vpow.pop %v1798
      %v1800 = vmul.f32 %v1753, 1.442695
      %v1801 = vpow.pop %v1800
      %v1802 = vmul.f32 %v1754, 1.442695
      %v1803 = vpow.pop %v1802
      %v1804 = vmul.f32 %v1755, 1.442695
      %v1805 = vpow.pop %v1804
      %v1806 = vmul.f32 %v1756, 1.442695
      %v1807 = vpow.pop %v1806
      %v1808 = vmul.f32 %v1757, 1.442695
      %v1809 = vpow.pop %v1808
      %v1810 = vmul.f32 %v1758, 1.442695
      %v1811 = vpow.pop %v1810
      %v1812 = vmul.f32 %v1759, 1.442695
      %v1813 = vpow.pop %v1812
      %v1814 = vmul.f32 %v1760, 1.442695
      %v1815 = vpow.pop %v1814
      %v1816 = vmul.f32 %v1761, 1.442695
      %v1817 = vpow.pop %v1816
      %v1818 = vmul.f32 %v1762, 1.442695
      %v1819 = vpow.pop %v1818
      %v1820 = vmul.f32 %v1763, 1.442695
      %v1821 = vpow.pop %v1820
      %v1822 = vmul.f32 %v1764, 1.442695
      %v1823 = vpow.pop %v1822
      %v1824 = vmul.f32 %v1765, 1.442695
      %v1825 = vpow.pop %v1824
      %v1826 = vmul.f32 %v1766, 1.442695
      %v1827 = vpow.pop %v1826
      %v1828 = vmul.f32 %v1767, 1.442695
      %v1829 = vpow.pop %v1828
      %v1830 = vmul.f32 %v1768, 1.442695
      %v1831 = vpow.pop %v1830
      %v1832 = vmul.f32 %v1769, 1.442695
      %v1833 = vpow.pop %v1832
      %v1834 = vpack.c.bf16 %v1775, %v1771
      %v1835 = vpack.c.bf16 %v1777, %v1773
      %v1836 = vpack.c.bf16 %v1783, %v1779
      %v1837 = vpack.c.bf16 %v1785, %v1781
      %v1838 = vpack.c.bf16 %v1791, %v1787
      %v1839 = vpack.c.bf16 %v1793, %v1789
      %v1840 = vpack.c.bf16 %v1799, %v1795
      %v1841 = vpack.c.bf16 %v1801, %v1797
      %v1842 = vpack.c.bf16 %v1807, %v1803
      %v1843 = vpack.c.bf16 %v1809, %v1805
      %v1844 = vpack.c.bf16 %v1815, %v1811
      %v1845 = vpack.c.bf16 %v1817, %v1813
      %v1846 = vpack.c.bf16 %v1823, %v1819
      %v1847 = vpack.c.bf16 %v1825, %v1821
      %v1848 = vpack.c.bf16 %v1831, %v1827
      %v1849 = vpack.c.bf16 %v1833, %v1829
      %v1854 = vunpack.c.l.b16 %v1513
      %v1855 = vunpack.c.h.b16 %v1513
      %v1856 = vunpack.c.l.b16 %v1514
      %v1857 = vunpack.c.h.b16 %v1514
      %v1858 = vunpack.c.l.b16 %v1515
      %v1859 = vunpack.c.h.b16 %v1515
      %v1860 = vunpack.c.l.b16 %v1516
      %v1861 = vunpack.c.h.b16 %v1516
      %v1862 = vpack.c.b16 %v1856, %v1854
      %v1863 = vpack.c.b16 %v1857, %v1855
      %v1864 = vpack.c.b16 %v1860, %v1858
      %v1865 = vpack.c.b16 %v1861, %v1859
      %1870 = vmatprep.subr.bf16.mxu0 %v1849
      %1871 = vmatpush1.bf16.xpose.msra.mxu0 %v1848
      %1872 = vmatprep.subr.bf16.mxu0 %v1847
      %1873 = vmatpush1.bf16.xpose.msra.mxu0 %v1846
      %1874 = vmatprep.subr.bf16.mxu0 %v1845
      %1875 = vmatpush1.bf16.xpose.msra.mxu0 %v1844
      %1876 = vmatprep.subr.bf16.mxu0 %v1843
      %1877 = vmatpush1.bf16.xpose.msra.mxu0 %v1842
      %1878 = vmatprep.subr.bf16.mxu0 %v1841
      %1879 = vmatpush1.bf16.xpose.msra.mxu0 %v1840
      %1880 = vmatprep.subr.bf16.mxu0 %v1839
      %1881 = vmatpush1.bf16.xpose.msra.mxu0 %v1838
      %1882 = vmatprep.subr.bf16.mxu0 %v1837
      %1883 = vmatpush1.bf16.xpose.msra.mxu0 %v1836
      %1884 = vmatprep.subr.bf16.mxu0 %v1835
      %1885 = vmatpush1.bf16.xpose.msra.mxu0 %v1834
      %1886 = vmatprep.subr.bf16.mxu0 0
      %1887 = vmatpush2.bf16.xpose.msra.mxu0 0
      %1888 = vmatprep.subr.bf16.mxu0 0
      %1889 = vmatpush2.bf16.xpose.msra.mxu0 0
      %1890 = vmatprep.subr.bf16.mxu0 0
      %1891 = vmatpush2.bf16.xpose.msra.mxu0 0
      %1892 = vmatprep.subr.bf16.mxu0 0
      %1893 = vmatpush2.bf16.xpose.msra.mxu0 0
      %1894 = vmatprep.subr.bf16.mxu0 0
      %1895 = vmatpush2.bf16.xpose.msra.mxu0 0
      %1896 = vmatprep.subr.bf16.mxu0 0
      %1897 = vmatpush2.bf16.xpose.msra.mxu0 0
      %1898 = vmatprep.subr.bf16.mxu0 0
      %1899 = vmatpush2.bf16.xpose.msra.mxu0 0
      %1900 = vmatprep.subr.bf16.mxu0 0
      %1901 = vmatpush2.bf16.xpose.msra.mxu0 0
      %1902 = vmatprep.mubr.bf16.mxu0 %v1863
      %1903 = vmatmul.mubr.bf16.gmra.mxu0 %v1862
      %v1904 = vpop.f32.mrf.mxu0
      %v1905 = vadd.f32 0.0, %v1904
      %v1906 = vpop.f32.mrf.mxu0
      %v1907 = vpop.f32.mrf.mxu0
      %v1908 = vadd.f32 0.0, %v1907
      %v1909 = vpop.f32.mrf.mxu0
      %1910 = vmatprep.mubr.bf16.mxu0 %v1865
      %1911 = vmatmul.mubr.bf16.gmra.mxu0 %v1864
      %v1912 = vpop.f32.mrf.mxu0
      %v1913 = vadd.f32 0.0, %v1912
      %v1914 = vpop.f32.mrf.mxu0
      %v1915 = vpop.f32.mrf.mxu0
      %v1916 = vadd.f32 0.0, %v1915
      %v1917 = vpop.f32.mrf.mxu0
      %1918 = vdwg.mxu0
      %1919 = vmatprep.subr.bf16.mxu0 %v1849
      %1920 = vmatpush1.bf16.xpose.msra.mxu0 %v1848
      %1921 = vmatprep.subr.bf16.mxu0 %v1847
      %1922 = vmatpush1.bf16.xpose.msra.mxu0 %v1846
      %1923 = vmatprep.subr.bf16.mxu0 %v1845
      %1924 = vmatpush1.bf16.xpose.msra.mxu0 %v1844
      %1925 = vmatprep.subr.bf16.mxu0 %v1843
      %1926 = vmatpush1.bf16.xpose.msra.mxu0 %v1842
      %1927 = vmatprep.subr.bf16.mxu0 %v1841
      %1928 = vmatpush1.bf16.xpose.msra.mxu0 %v1840
      %1929 = vmatprep.subr.bf16.mxu0 %v1839
      %1930 = vmatpush1.bf16.xpose.msra.mxu0 %v1838
      %1931 = vmatprep.subr.bf16.mxu0 %v1837
      %1932 = vmatpush1.bf16.xpose.msra.mxu0 %v1836
      %1933 = vmatprep.subr.bf16.mxu0 %v1835
      %1934 = vmatpush1.bf16.xpose.msra.mxu0 %v1834
      %1935 = vmatprep.subr.bf16.mxu0 0
      %1936 = vmatpush2.bf16.xpose.msra.mxu0 0
      %1937 = vmatprep.subr.bf16.mxu0 0
      %1938 = vmatpush2.bf16.xpose.msra.mxu0 0
      %1939 = vmatprep.subr.bf16.mxu0 0
      %1940 = vmatpush2.bf16.xpose.msra.mxu0 0
      %1941 = vmatprep.subr.bf16.mxu0 0
      %1942 = vmatpush2.bf16.xpose.msra.mxu0 0
      %1943 = vmatprep.subr.bf16.mxu0 0
      %1944 = vmatpush2.bf16.xpose.msra.mxu0 0
      %1945 = vmatprep.subr.bf16.mxu0 0
      %1946 = vmatpush2.bf16.xpose.msra.mxu0 0
      %1947 = vmatprep.subr.bf16.mxu0 0
      %1948 = vmatpush2.bf16.xpose.msra.mxu0 0
      %1949 = vmatprep.subr.bf16.mxu0 0
      %1950 = vmatpush2.bf16.xpose.msra.mxu0 0
      %1951 = vmatprep.mubr.bf16.mxu0 1065369472
      %1952 = vmatmul.mubr.bf16.gmra.mxu0 1065369472
      %v1953 = vpop.f32.mrf.mxu0
      %v1954 = vadd.f32 0.0, %v1953
      %v1955 = vpop.f32.mrf.mxu0
      %v1956 = vpop.f32.mrf.mxu0
      %v1957 = vpop.f32.mrf.mxu0
      %1958 = vdwg.mxu0
      %v1959 = vrcp.pop %v1954
      %v1960 = vlaneseq
      %v1961 = vshrl.u32 %v1960, 7
      %v1962 = vsub.s32 0, %v1961
      %v1963 = vrot.slane %v1959, %v1962
      %v1964 = vmul.f32 %v1905, %v1963
      %v1965 = vmul.f32 %v1908, %v1963
      %v1966 = vmul.f32 %v1913, %v1963
      %v1967 = vmul.f32 %v1916, %v1963
      %1968 = vst [vmem:[#allocation4 + $0x20] sm:$0xff] %v1964
      %1969 = vst [vmem:[#allocation4 + $0x28] sm:$0xff] %v1965
      %1970 = vst [vmem:[#allocation4 + $0x30] sm:$0xff] %v1966
      %1971 = vst [vmem:[#allocation4 + $0x38] sm:$0xff] %v1967
      %v1972 = vld [vmem:[#allocation2 + $0x40] sm:$0xff]
      %v1973 = vld [vmem:[#allocation2 + $0x48] sm:$0xff]
      %v1974 = vld [vmem:[#allocation2 + $0x50] sm:$0xff]
      %v1975 = vld [vmem:[#allocation2 + $0x58] sm:$0xff]
      %v1976 = vld [vmem:[#allocation3 + $0x40] sm:$0xff]
      %v1977 = vld [vmem:[#allocation3 + $0x48] sm:$0xff]
      %v1978 = vld [vmem:[#allocation3 + $0x50] sm:$0xff]
      %v1979 = vld [vmem:[#allocation3 + $0x58] sm:$0xff]
      %1980 = vxpose.xlu0.c.b16.start [1/8] %v1041, 128
      %1981 = vxpose.xlu0.c.b16.cont [2/8] %v1042, 128
      %1982 = vxpose.xlu0.c.b16.cont [3/8] 0, 128
      %1983 = vxpose.xlu0.c.b16.cont [4/8] 0, 128
      %1984 = vxpose.xlu0.c.b16.cont [5/8] 0, 128
      %1985 = vxpose.xlu0.c.b16.cont [6/8] 0, 128
      %1986 = vxpose.xlu0.c.b16.cont [7/8] 0, 128
      %1987 = vxpose.xlu0.c.b16.end [8/8] 0, 128
      %v1988 = vpop.trf.xlu0
      %v1989 = vpop.trf.xlu0
      %v1990 = vpop.trf.xlu0
      %v1991 = vpop.trf.xlu0
      %v1992 = vpop.trf.xlu0
      %v1993 = vpop.trf.xlu0
      %v1994 = vpop.trf.xlu0
      %v1995 = vpop.trf.xlu0
      %v2000 = vunpack.c.l.b16 %v1972
      %v2001 = vunpack.c.h.b16 %v1972
      %v2002 = vunpack.c.l.b16 %v1973
      %v2003 = vunpack.c.h.b16 %v1973
      %v2004 = vunpack.c.l.b16 %v1974
      %v2005 = vunpack.c.h.b16 %v1974
      %v2006 = vunpack.c.l.b16 %v1975
      %v2007 = vunpack.c.h.b16 %v1975
      %v2008 = vpack.c.b16 %v2002, %v2000
      %v2009 = vpack.c.b16 %v2003, %v2001
      %v2010 = vpack.c.b16 %v2006, %v2004
      %v2011 = vpack.c.b16 %v2007, %v2005
      %v2017 = vsel %vm1089, %v1988, 0
      %v2020 = vsel %vm1089, %v1989, 0
      %v2023 = vsel %vm1089, %v1990, 0
      %v2026 = vsel %vm1089, %v1991, 0
      %v2029 = vsel %vm1089, %v1992, 0
      %v2032 = vsel %vm1089, %v1993, 0
      %v2035 = vsel %vm1089, %v1994, 0
      %v2038 = vsel %vm1089, %v1995, 0
      %2040 = vmatprep.subr.bf16.mxu0 0
      %2041 = vmatpush1.bf16.msra.mxu0 0
      %2042 = vmatprep.subr.bf16.mxu0 0
      %2043 = vmatpush1.bf16.msra.mxu0 0
      %2044 = vmatprep.subr.bf16.mxu0 0
      %2045 = vmatpush1.bf16.msra.mxu0 0
      %2046 = vmatprep.subr.bf16.mxu0 0
      %2047 = vmatpush1.bf16.msra.mxu0 0
      %2048 = vmatprep.subr.bf16.mxu0 0
      %2049 = vmatpush1.bf16.msra.mxu0 0
      %2050 = vmatprep.subr.bf16.mxu0 0
      %2051 = vmatpush1.bf16.msra.mxu0 0
      %2052 = vmatprep.subr.bf16.mxu0 %v2011
      %2053 = vmatpush1.bf16.msra.mxu0 %v2010
      %2054 = vmatprep.subr.bf16.mxu0 %v2009
      %2055 = vmatpush1.bf16.msra.mxu0 %v2008
      %2056 = vmatprep.subr.bf16.mxu0 0
      %2057 = vmatpush2.bf16.msra.mxu0 0
      %2058 = vmatprep.subr.bf16.mxu0 0
      %2059 = vmatpush2.bf16.msra.mxu0 0
      %2060 = vmatprep.subr.bf16.mxu0 0
      %2061 = vmatpush2.bf16.msra.mxu0 0
      %2062 = vmatprep.subr.bf16.mxu0 0
      %2063 = vmatpush2.bf16.msra.mxu0 0
      %2064 = vmatprep.subr.bf16.mxu0 0
      %2065 = vmatpush2.bf16.msra.mxu0 0
      %2066 = vmatprep.subr.bf16.mxu0 0
      %2067 = vmatpush2.bf16.msra.mxu0 0
      %2068 = vmatprep.subr.bf16.mxu0 0
      %2069 = vmatpush2.bf16.msra.mxu0 0
      %2070 = vmatprep.subr.bf16.mxu0 0
      %2071 = vmatpush2.bf16.msra.mxu0 0
      %2072 = vmatprep.mubr.bf16.mxu0 0
      %2073 = vmatmul.mubr.bf16.gmra.mxu0 %v2017
      %v2074 = vpop.f32.mrf.mxu0
      %v2075 = vadd.f32 0.0, %v2074
      %v2076 = vpop.f32.mrf.mxu0
      %v2077 = vadd.f32 0.0, %v2076
      %v2078 = vpop.f32.mrf.mxu0
      %v2079 = vadd.f32 0.0, %v2078
      %v2080 = vpop.f32.mrf.mxu0
      %v2081 = vadd.f32 0.0, %v2080
      %2082 = vmatprep.mubr.bf16.mxu0 0
      %2083 = vmatmul.mubr.bf16.gmra.mxu0 %v2020
      %v2084 = vpop.f32.mrf.mxu0
      %v2085 = vadd.f32 0.0, %v2084
      %v2086 = vpop.f32.mrf.mxu0
      %v2087 = vadd.f32 0.0, %v2086
      %v2088 = vpop.f32.mrf.mxu0
      %v2089 = vadd.f32 0.0, %v2088
      %v2090 = vpop.f32.mrf.mxu0
      %v2091 = vadd.f32 0.0, %v2090
      %2092 = vmatprep.mubr.bf16.mxu0 0
      %2093 = vmatmul.mubr.bf16.gmra.mxu0 %v2023
      %v2094 = vpop.f32.mrf.mxu0
      %v2095 = vadd.f32 0.0, %v2094
      %v2096 = vpop.f32.mrf.mxu0
      %v2097 = vadd.f32 0.0, %v2096
      %v2098 = vpop.f32.mrf.mxu0
      %v2099 = vadd.f32 0.0, %v2098
      %v2100 = vpop.f32.mrf.mxu0
      %v2101 = vadd.f32 0.0, %v2100
      %2102 = vmatprep.mubr.bf16.mxu0 0
      %2103 = vmatmul.mubr.bf16.gmra.mxu0 %v2026
      %v2104 = vpop.f32.mrf.mxu0
      %v2105 = vadd.f32 0.0, %v2104
      %v2106 = vpop.f32.mrf.mxu0
      %v2107 = vadd.f32 0.0, %v2106
      %v2108 = vpop.f32.mrf.mxu0
      %v2109 = vadd.f32 0.0, %v2108
      %v2110 = vpop.f32.mrf.mxu0
      %v2111 = vadd.f32 0.0, %v2110
      %2112 = vmatprep.mubr.bf16.mxu0 0
      %2113 = vmatmul.mubr.bf16.gmra.mxu0 %v2029
      %v2114 = vpop.f32.mrf.mxu0
      %v2115 = vadd.f32 0.0, %v2114
      %v2116 = vpop.f32.mrf.mxu0
      %v2117 = vadd.f32 0.0, %v2116
      %v2118 = vpop.f32.mrf.mxu0
      %v2119 = vadd.f32 0.0, %v2118
      %v2120 = vpop.f32.mrf.mxu0
      %v2121 = vadd.f32 0.0, %v2120
      %2122 = vmatprep.mubr.bf16.mxu0 0
      %2123 = vmatmul.mubr.bf16.gmra.mxu0 %v2032
      %v2124 = vpop.f32.mrf.mxu0
      %v2125 = vadd.f32 0.0, %v2124
      %v2126 = vpop.f32.mrf.mxu0
      %v2127 = vadd.f32 0.0, %v2126
      %v2128 = vpop.f32.mrf.mxu0
      %v2129 = vadd.f32 0.0, %v2128
      %v2130 = vpop.f32.mrf.mxu0
      %v2131 = vadd.f32 0.0, %v2130
      %2132 = vmatprep.mubr.bf16.mxu0 0
      %2133 = vmatmul.mubr.bf16.gmra.mxu0 %v2035
      %v2134 = vpop.f32.mrf.mxu0
      %v2135 = vadd.f32 0.0, %v2134
      %v2136 = vpop.f32.mrf.mxu0
      %v2137 = vadd.f32 0.0, %v2136
      %v2138 = vpop.f32.mrf.mxu0
      %v2139 = vadd.f32 0.0, %v2138
      %v2140 = vpop.f32.mrf.mxu0
      %v2141 = vadd.f32 0.0, %v2140
      %2142 = vmatprep.mubr.bf16.mxu0 0
      %2143 = vmatmul.mubr.bf16.gmra.mxu0 %v2038
      %v2144 = vpop.f32.mrf.mxu0
      %v2145 = vadd.f32 0.0, %v2144
      %v2146 = vpop.f32.mrf.mxu0
      %v2147 = vadd.f32 0.0, %v2146
      %v2148 = vpop.f32.mrf.mxu0
      %v2149 = vadd.f32 0.0, %v2148
      %v2150 = vpop.f32.mrf.mxu0
      %v2151 = vadd.f32 0.0, %v2150
      %2152 = vdwg.mxu0
      %v2153 = vmax.f32 %v2075, %v2077
      %2154 = vmax.xlane.f32.xlu0 %v2153
      %v2155 = vpop.xlane.xlu0 %2154
      %v2156 = vmax.f32 %v2079, %v2081
      %2157 = vmax.xlane.f32.xlu0 %v2156
      %v2158 = vpop.xlane.xlu0 %2157
      %v2159 = vmax.f32 %v2085, %v2087
      %2160 = vmax.xlane.f32.xlu0 %v2159
      %v2161 = vpop.xlane.xlu0 %2160
      %v2162 = vmax.f32 %v2089, %v2091
      %2163 = vmax.xlane.f32.xlu0 %v2162
      %v2164 = vpop.xlane.xlu0 %2163
      %v2165 = vmax.f32 %v2095, %v2097
      %2166 = vmax.xlane.f32.xlu0 %v2165
      %v2167 = vpop.xlane.xlu0 %2166
      %v2168 = vmax.f32 %v2099, %v2101
      %2169 = vmax.xlane.f32.xlu0 %v2168
      %v2170 = vpop.xlane.xlu0 %2169
      %v2171 = vmax.f32 %v2105, %v2107
      %2172 = vmax.xlane.f32.xlu0 %v2171
      %v2173 = vpop.xlane.xlu0 %2172
      %v2174 = vmax.f32 %v2109, %v2111
      %2175 = vmax.xlane.f32.xlu0 %v2174
      %v2176 = vpop.xlane.xlu0 %2175
      %v2177 = vmax.f32 %v2115, %v2117
      %2178 = vmax.xlane.f32.xlu0 %v2177
      %v2179 = vpop.xlane.xlu0 %2178
      %v2180 = vmax.f32 %v2119, %v2121
      %2181 = vmax.xlane.f32.xlu0 %v2180
      %v2182 = vpop.xlane.xlu0 %2181
      %v2183 = vmax.f32 %v2125, %v2127
      %2184 = vmax.xlane.f32.xlu0 %v2183
      %v2185 = vpop.xlane.xlu0 %2184
      %v2186 = vmax.f32 %v2129, %v2131
      %2187 = vmax.xlane.f32.xlu0 %v2186
      %v2188 = vpop.xlane.xlu0 %2187
      %v2189 = vmax.f32 %v2135, %v2137
      %2190 = vmax.xlane.f32.xlu0 %v2189
      %v2191 = vpop.xlane.xlu0 %2190
      %v2192 = vmax.f32 %v2139, %v2141
      %2193 = vmax.xlane.f32.xlu0 %v2192
      %v2194 = vpop.xlane.xlu0 %2193
      %v2195 = vmax.f32 %v2145, %v2147
      %2196 = vmax.xlane.f32.xlu0 %v2195
      %v2197 = vpop.xlane.xlu0 %2196
      %v2198 = vmax.f32 %v2149, %v2151
      %2199 = vmax.xlane.f32.xlu0 %v2198
      %v2200 = vpop.xlane.xlu0 %2199
      %v2201 = vsub.f32 %v2075, %v2155
      %v2202 = vsub.f32 %v2077, %v2155
      %v2203 = vsub.f32 %v2079, %v2158
      %v2204 = vsub.f32 %v2081, %v2158
      %v2205 = vsub.f32 %v2085, %v2161
      %v2206 = vsub.f32 %v2087, %v2161
      %v2207 = vsub.f32 %v2089, %v2164
      %v2208 = vsub.f32 %v2091, %v2164
      %v2209 = vsub.f32 %v2095, %v2167
      %v2210 = vsub.f32 %v2097, %v2167
      %v2211 = vsub.f32 %v2099, %v2170
      %v2212 = vsub.f32 %v2101, %v2170
      %v2213 = vsub.f32 %v2105, %v2173
      %v2214 = vsub.f32 %v2107, %v2173
      %v2215 = vsub.f32 %v2109, %v2176
      %v2216 = vsub.f32 %v2111, %v2176
      %v2217 = vsub.f32 %v2115, %v2179
      %v2218 = vsub.f32 %v2117, %v2179
      %v2219 = vsub.f32 %v2119, %v2182
      %v2220 = vsub.f32 %v2121, %v2182
      %v2221 = vsub.f32 %v2125, %v2185
      %v2222 = vsub.f32 %v2127, %v2185
      %v2223 = vsub.f32 %v2129, %v2188
      %v2224 = vsub.f32 %v2131, %v2188
      %v2225 = vsub.f32 %v2135, %v2191
      %v2226 = vsub.f32 %v2137, %v2191
      %v2227 = vsub.f32 %v2139, %v2194
      %v2228 = vsub.f32 %v2141, %v2194
      %v2229 = vsub.f32 %v2145, %v2197
      %v2230 = vsub.f32 %v2147, %v2197
      %v2231 = vsub.f32 %v2149, %v2200
      %v2232 = vsub.f32 %v2151, %v2200
      %v2233 = vmul.f32 %v2201, 1.442695
      %v2234 = vpow.pop %v2233
      %v2235 = vmul.f32 %v2202, 1.442695
      %v2236 = vpow.pop %v2235
      %v2237 = vmul.f32 %v2203, 1.442695
      %v2238 = vpow.pop %v2237
      %v2239 = vmul.f32 %v2204, 1.442695
      %v2240 = vpow.pop %v2239
      %v2241 = vmul.f32 %v2205, 1.442695
      %v2242 = vpow.pop %v2241
      %v2243 = vmul.f32 %v2206, 1.442695
      %v2244 = vpow.pop %v2243
      %v2245 = vmul.f32 %v2207, 1.442695
      %v2246 = vpow.pop %v2245
      %v2247 = vmul.f32 %v2208, 1.442695
      %v2248 = vpow.pop %v2247
      %v2249 = vmul.f32 %v2209, 1.442695
      %v2250 = vpow.pop %v2249
      %v2251 = vmul.f32 %v2210, 1.442695
      %v2252 = vpow.pop %v2251
      %v2253 = vmul.f32 %v2211, 1.442695
      %v2254 = vpow.pop %v2253
      %v2255 = vmul.f32 %v2212, 1.442695
      %v2256 = vpow.pop %v2255
      %v2257 = vmul.f32 %v2213, 1.442695
      %v2258 = vpow.pop %v2257
      %v2259 = vmul.f32 %v2214, 1.442695
      %v2260 = vpow.pop %v2259
      %v2261 = vmul.f32 %v2215, 1.442695
      %v2262 = vpow.pop %v2261
      %v2263 = vmul.f32 %v2216, 1.442695
      %v2264 = vpow.pop %v2263
      %v2265 = vmul.f32 %v2217, 1.442695
      %v2266 = vpow.pop %v2265
      %v2267 = vmul.f32 %v2218, 1.442695
      %v2268 = vpow.pop %v2267
      %v2269 = vmul.f32 %v2219, 1.442695
      %v2270 = vpow.pop %v2269
      %v2271 = vmul.f32 %v2220, 1.442695
      %v2272 = vpow.pop %v2271
      %v2273 = vmul.f32 %v2221, 1.442695
      %v2274 = vpow.pop %v2273
      %v2275 = vmul.f32 %v2222, 1.442695
      %v2276 = vpow.pop %v2275
      %v2277 = vmul.f32 %v2223, 1.442695
      %v2278 = vpow.pop %v2277
      %v2279 = vmul.f32 %v2224, 1.442695
      %v2280 = vpow.pop %v2279
      %v2281 = vmul.f32 %v2225, 1.442695
      %v2282 = vpow.pop %v2281
      %v2283 = vmul.f32 %v2226, 1.442695
      %v2284 = vpow.pop %v2283
      %v2285 = vmul.f32 %v2227, 1.442695
      %v2286 = vpow.pop %v2285
      %v2287 = vmul.f32 %v2228, 1.442695
      %v2288 = vpow.pop %v2287
      %v2289 = vmul.f32 %v2229, 1.442695
      %v2290 = vpow.pop %v2289
      %v2291 = vmul.f32 %v2230, 1.442695
      %v2292 = vpow.pop %v2291
      %v2293 = vmul.f32 %v2231, 1.442695
      %v2294 = vpow.pop %v2293
      %v2295 = vmul.f32 %v2232, 1.442695
      %v2296 = vpow.pop %v2295
      %v2297 = vpack.c.bf16 %v2238, %v2234
      %v2298 = vpack.c.bf16 %v2240, %v2236
      %v2299 = vpack.c.bf16 %v2246, %v2242
      %v2300 = vpack.c.bf16 %v2248, %v2244
      %v2301 = vpack.c.bf16 %v2254, %v2250
      %v2302 = vpack.c.bf16 %v2256, %v2252
      %v2303 = vpack.c.bf16 %v2262, %v2258
      %v2304 = vpack.c.bf16 %v2264, %v2260
      %v2305 = vpack.c.bf16 %v2270, %v2266
      %v2306 = vpack.c.bf16 %v2272, %v2268
      %v2307 = vpack.c.bf16 %v2278, %v2274
      %v2308 = vpack.c.bf16 %v2280, %v2276
      %v2309 = vpack.c.bf16 %v2286, %v2282
      %v2310 = vpack.c.bf16 %v2288, %v2284
      %v2311 = vpack.c.bf16 %v2294, %v2290
      %v2312 = vpack.c.bf16 %v2296, %v2292
      %v2317 = vunpack.c.l.b16 %v1976
      %v2318 = vunpack.c.h.b16 %v1976
      %v2319 = vunpack.c.l.b16 %v1977
      %v2320 = vunpack.c.h.b16 %v1977
      %v2321 = vunpack.c.l.b16 %v1978
      %v2322 = vunpack.c.h.b16 %v1978
      %v2323 = vunpack.c.l.b16 %v1979
      %v2324 = vunpack.c.h.b16 %v1979
      %v2325 = vpack.c.b16 %v2319, %v2317
      %v2326 = vpack.c.b16 %v2320, %v2318
      %v2327 = vpack.c.b16 %v2323, %v2321
      %v2328 = vpack.c.b16 %v2324, %v2322
      %2333 = vmatprep.subr.bf16.mxu0 %v2312
      %2334 = vmatpush1.bf16.xpose.msra.mxu0 %v2311
      %2335 = vmatprep.subr.bf16.mxu0 %v2310
      %2336 = vmatpush1.bf16.xpose.msra.mxu0 %v2309
      %2337 = vmatprep.subr.bf16.mxu0 %v2308
      %2338 = vmatpush1.bf16.xpose.msra.mxu0 %v2307
      %2339 = vmatprep.subr.bf16.mxu0 %v2306
      %2340 = vmatpush1.bf16.xpose.msra.mxu0 %v2305
      %2341 = vmatprep.subr.bf16.mxu0 %v2304
      %2342 = vmatpush1.bf16.xpose.msra.mxu0 %v2303
      %2343 = vmatprep.subr.bf16.mxu0 %v2302
      %2344 = vmatpush1.bf16.xpose.msra.mxu0 %v2301
      %2345 = vmatprep.subr.bf16.mxu0 %v2300
      %2346 = vmatpush1.bf16.xpose.msra.mxu0 %v2299
      %2347 = vmatprep.subr.bf16.mxu0 %v2298
      %2348 = vmatpush1.bf16.xpose.msra.mxu0 %v2297
      %2349 = vmatprep.subr.bf16.mxu0 0
      %2350 = vmatpush2.bf16.xpose.msra.mxu0 0
      %2351 = vmatprep.subr.bf16.mxu0 0
      %2352 = vmatpush2.bf16.xpose.msra.mxu0 0
      %2353 = vmatprep.subr.bf16.mxu0 0
      %2354 = vmatpush2.bf16.xpose.msra.mxu0 0
      %2355 = vmatprep.subr.bf16.mxu0 0
      %2356 = vmatpush2.bf16.xpose.msra.mxu0 0
      %2357 = vmatprep.subr.bf16.mxu0 0
      %2358 = vmatpush2.bf16.xpose.msra.mxu0 0
      %2359 = vmatprep.subr.bf16.mxu0 0
      %2360 = vmatpush2.bf16.xpose.msra.mxu0 0
      %2361 = vmatprep.subr.bf16.mxu0 0
      %2362 = vmatpush2.bf16.xpose.msra.mxu0 0
      %2363 = vmatprep.subr.bf16.mxu0 0
      %2364 = vmatpush2.bf16.xpose.msra.mxu0 0
      %2365 = vmatprep.mubr.bf16.mxu0 %v2326
      %2366 = vmatmul.mubr.bf16.gmra.mxu0 %v2325
      %v2367 = vpop.f32.mrf.mxu0
      %v2368 = vadd.f32 0.0, %v2367
      %v2369 = vpop.f32.mrf.mxu0
      %v2370 = vpop.f32.mrf.mxu0
      %v2371 = vadd.f32 0.0, %v2370
      %v2372 = vpop.f32.mrf.mxu0
      %2373 = vmatprep.mubr.bf16.mxu0 %v2328
      %2374 = vmatmul.mubr.bf16.gmra.mxu0 %v2327
      %v2375 = vpop.f32.mrf.mxu0
      %v2376 = vadd.f32 0.0, %v2375
      %v2377 = vpop.f32.mrf.mxu0
      %v2378 = vpop.f32.mrf.mxu0
      %v2379 = vadd.f32 0.0, %v2378
      %v2380 = vpop.f32.mrf.mxu0
      %2381 = vdwg.mxu0
      %2382 = vmatprep.subr.bf16.mxu0 %v2312
      %2383 = vmatpush1.bf16.xpose.msra.mxu0 %v2311
      %2384 = vmatprep.subr.bf16.mxu0 %v2310
      %2385 = vmatpush1.bf16.xpose.msra.mxu0 %v2309
      %2386 = vmatprep.subr.bf16.mxu0 %v2308
      %2387 = vmatpush1.bf16.xpose.msra.mxu0 %v2307
      %2388 = vmatprep.subr.bf16.mxu0 %v2306
      %2389 = vmatpush1.bf16.xpose.msra.mxu0 %v2305
      %2390 = vmatprep.subr.bf16.mxu0 %v2304
      %2391 = vmatpush1.bf16.xpose.msra.mxu0 %v2303
      %2392 = vmatprep.subr.bf16.mxu0 %v2302
      %2393 = vmatpush1.bf16.xpose.msra.mxu0 %v2301
      %2394 = vmatprep.subr.bf16.mxu0 %v2300
      %2395 = vmatpush1.bf16.xpose.msra.mxu0 %v2299
      %2396 = vmatprep.subr.bf16.mxu0 %v2298
      %2397 = vmatpush1.bf16.xpose.msra.mxu0 %v2297
      %2398 = vmatprep.subr.bf16.mxu0 0
      %2399 = vmatpush2.bf16.xpose.msra.mxu0 0
      %2400 = vmatprep.subr.bf16.mxu0 0
      %2401 = vmatpush2.bf16.xpose.msra.mxu0 0
      %2402 = vmatprep.subr.bf16.mxu0 0
      %2403 = vmatpush2.bf16.xpose.msra.mxu0 0
      %2404 = vmatprep.subr.bf16.mxu0 0
      %2405 = vmatpush2.bf16.xpose.msra.mxu0 0
      %2406 = vmatprep.subr.bf16.mxu0 0
      %2407 = vmatpush2.bf16.xpose.msra.mxu0 0
      %2408 = vmatprep.subr.bf16.mxu0 0
      %2409 = vmatpush2.bf16.xpose.msra.mxu0 0
      %2410 = vmatprep.subr.bf16.mxu0 0
      %2411 = vmatpush2.bf16.xpose.msra.mxu0 0
      %2412 = vmatprep.subr.bf16.mxu0 0
      %2413 = vmatpush2.bf16.xpose.msra.mxu0 0
      %2414 = vmatprep.mubr.bf16.mxu0 1065369472
      %2415 = vmatmul.mubr.bf16.gmra.mxu0 1065369472
      %v2416 = vpop.f32.mrf.mxu0
      %v2417 = vadd.f32 0.0, %v2416
      %v2418 = vpop.f32.mrf.mxu0
      %v2419 = vpop.f32.mrf.mxu0
      %v2420 = vpop.f32.mrf.mxu0
      %2421 = vdwg.mxu0
      %v2422 = vrcp.pop %v2417
      %v2423 = vlaneseq
      %v2424 = vshrl.u32 %v2423, 7
      %v2425 = vsub.s32 0, %v2424
      %v2426 = vrot.slane %v2422, %v2425
      %v2427 = vmul.f32 %v2368, %v2426
      %v2428 = vmul.f32 %v2371, %v2426
      %v2429 = vmul.f32 %v2376, %v2426
      %v2430 = vmul.f32 %v2379, %v2426
      %2431 = vst [vmem:[#allocation4 + $0x40] sm:$0xff] %v2427
      %2432 = vst [vmem:[#allocation4 + $0x48] sm:$0xff] %v2428
      %2433 = vst [vmem:[#allocation4 + $0x50] sm:$0xff] %v2429
      %2434 = vst [vmem:[#allocation4 + $0x58] sm:$0xff] %v2430
      %v2435 = vld [vmem:[#allocation2 + $0x60] sm:$0xff]
      %v2436 = vld [vmem:[#allocation2 + $0x68] sm:$0xff]
      %v2437 = vld [vmem:[#allocation2 + $0x70] sm:$0xff]
      %v2438 = vld [vmem:[#allocation2 + $0x78] sm:$0xff]
      %v2439 = vld [vmem:[#allocation3 + $0x60] sm:$0xff]
      %v2440 = vld [vmem:[#allocation3 + $0x68] sm:$0xff]
      %v2441 = vld [vmem:[#allocation3 + $0x70] sm:$0xff]
      %v2442 = vld [vmem:[#allocation3 + $0x78] sm:$0xff]
      %2443 = vxpose.xlu0.c.b16.start [1/8] %v1043, 128
      %2444 = vxpose.xlu0.c.b16.cont [2/8] %v1044, 128
      %2445 = vxpose.xlu0.c.b16.cont [3/8] 0, 128
      %2446 = vxpose.xlu0.c.b16.cont [4/8] 0, 128
      %2447 = vxpose.xlu0.c.b16.cont [5/8] 0, 128
      %2448 = vxpose.xlu0.c.b16.cont [6/8] 0, 128
      %2449 = vxpose.xlu0.c.b16.cont [7/8] 0, 128
      %2450 = vxpose.xlu0.c.b16.end [8/8] 0, 128
      %v2451 = vpop.trf.xlu0
      %v2452 = vpop.trf.xlu0
      %v2453 = vpop.trf.xlu0
      %v2454 = vpop.trf.xlu0
      %v2455 = vpop.trf.xlu0
      %v2456 = vpop.trf.xlu0
      %v2457 = vpop.trf.xlu0
      %v2458 = vpop.trf.xlu0
      %v2463 = vunpack.c.l.b16 %v2435
      %v2464 = vunpack.c.h.b16 %v2435
      %v2465 = vunpack.c.l.b16 %v2436
      %v2466 = vunpack.c.h.b16 %v2436
      %v2467 = vunpack.c.l.b16 %v2437
      %v2468 = vunpack.c.h.b16 %v2437
      %v2469 = vunpack.c.l.b16 %v2438
      %v2470 = vunpack.c.h.b16 %v2438
      %v2471 = vpack.c.b16 %v2465, %v2463
      %v2472 = vpack.c.b16 %v2466, %v2464
      %v2473 = vpack.c.b16 %v2469, %v2467
      %v2474 = vpack.c.b16 %v2470, %v2468
      %v2480 = vsel %vm1089, %v2451, 0
      %v2483 = vsel %vm1089, %v2452, 0
      %v2486 = vsel %vm1089, %v2453, 0
      %v2489 = vsel %vm1089, %v2454, 0
      %v2492 = vsel %vm1089, %v2455, 0
      %v2495 = vsel %vm1089, %v2456, 0
      %v2498 = vsel %vm1089, %v2457, 0
      %v2501 = vsel %vm1089, %v2458, 0
      %2503 = vmatprep.subr.bf16.mxu0 0
      %2504 = vmatpush1.bf16.msra.mxu0 0
      %2505 = vmatprep.subr.bf16.mxu0 0
      %2506 = vmatpush1.bf16.msra.mxu0 0
      %2507 = vmatprep.subr.bf16.mxu0 0
      %2508 = vmatpush1.bf16.msra.mxu0 0
      %2509 = vmatprep.subr.bf16.mxu0 0
      %2510 = vmatpush1.bf16.msra.mxu0 0
      %2511 = vmatprep.subr.bf16.mxu0 0
      %2512 = vmatpush1.bf16.msra.mxu0 0
      %2513 = vmatprep.subr.bf16.mxu0 0
      %2514 = vmatpush1.bf16.msra.mxu0 0
      %2515 = vmatprep.subr.bf16.mxu0 %v2474
      %2516 = vmatpush1.bf16.msra.mxu0 %v2473
      %2517 = vmatprep.subr.bf16.mxu0 %v2472
      %2518 = vmatpush1.bf16.msra.mxu0 %v2471
      %2519 = vmatprep.subr.bf16.mxu0 0
      %2520 = vmatpush2.bf16.msra.mxu0 0
      %2521 = vmatprep.subr.bf16.mxu0 0
      %2522 = vmatpush2.bf16.msra.mxu0 0
      %2523 = vmatprep.subr.bf16.mxu0 0
      %2524 = vmatpush2.bf16.msra.mxu0 0
      %2525 = vmatprep.subr.bf16.mxu0 0
      %2526 = vmatpush2.bf16.msra.mxu0 0
      %2527 = vmatprep.subr.bf16.mxu0 0
      %2528 = vmatpush2.bf16.msra.mxu0 0
      %2529 = vmatprep.subr.bf16.mxu0 0
      %2530 = vmatpush2.bf16.msra.mxu0 0
      %2531 = vmatprep.subr.bf16.mxu0 0
      %2532 = vmatpush2.bf16.msra.mxu0 0
      %2533 = vmatprep.subr.bf16.mxu0 0
      %2534 = vmatpush2.bf16.msra.mxu0 0
      %2535 = vmatprep.mubr.bf16.mxu0 0
      %2536 = vmatmul.mubr.bf16.gmra.mxu0 %v2480
      %v2537 = vpop.f32.mrf.mxu0
      %v2538 = vadd.f32 0.0, %v2537
      %v2539 = vpop.f32.mrf.mxu0
      %v2540 = vadd.f32 0.0, %v2539
      %v2541 = vpop.f32.mrf.mxu0
      %v2542 = vadd.f32 0.0, %v2541
      %v2543 = vpop.f32.mrf.mxu0
      %v2544 = vadd.f32 0.0, %v2543
      %2545 = vmatprep.mubr.bf16.mxu0 0
      %2546 = vmatmul.mubr.bf16.gmra.mxu0 %v2483
      %v2547 = vpop.f32.mrf.mxu0
      %v2548 = vadd.f32 0.0, %v2547
      %v2549 = vpop.f32.mrf.mxu0
      %v2550 = vadd.f32 0.0, %v2549
      %v2551 = vpop.f32.mrf.mxu0
      %v2552 = vadd.f32 0.0, %v2551
      %v2553 = vpop.f32.mrf.mxu0
      %v2554 = vadd.f32 0.0, %v2553
      %2555 = vmatprep.mubr.bf16.mxu0 0
      %2556 = vmatmul.mubr.bf16.gmra.mxu0 %v2486
      %v2557 = vpop.f32.mrf.mxu0
      %v2558 = vadd.f32 0.0, %v2557
      %v2559 = vpop.f32.mrf.mxu0
      %v2560 = vadd.f32 0.0, %v2559
      %v2561 = vpop.f32.mrf.mxu0
      %v2562 = vadd.f32 0.0, %v2561
      %v2563 = vpop.f32.mrf.mxu0
      %v2564 = vadd.f32 0.0, %v2563
      %2565 = vmatprep.mubr.bf16.mxu0 0
      %2566 = vmatmul.mubr.bf16.gmra.mxu0 %v2489
      %v2567 = vpop.f32.mrf.mxu0
      %v2568 = vadd.f32 0.0, %v2567
      %v2569 = vpop.f32.mrf.mxu0
      %v2570 = vadd.f32 0.0, %v2569
      %v2571 = vpop.f32.mrf.mxu0
      %v2572 = vadd.f32 0.0, %v2571
      %v2573 = vpop.f32.mrf.mxu0
      %v2574 = vadd.f32 0.0, %v2573
      %2575 = vmatprep.mubr.bf16.mxu0 0
      %2576 = vmatmul.mubr.bf16.gmra.mxu0 %v2492
      %v2577 = vpop.f32.mrf.mxu0
      %v2578 = vadd.f32 0.0, %v2577
      %v2579 = vpop.f32.mrf.mxu0
      %v2580 = vadd.f32 0.0, %v2579
      %v2581 = vpop.f32.mrf.mxu0
      %v2582 = vadd.f32 0.0, %v2581
      %v2583 = vpop.f32.mrf.mxu0
      %v2584 = vadd.f32 0.0, %v2583
      %2585 = vmatprep.mubr.bf16.mxu0 0
      %2586 = vmatmul.mubr.bf16.gmra.mxu0 %v2495
      %v2587 = vpop.f32.mrf.mxu0
      %v2588 = vadd.f32 0.0, %v2587
      %v2589 = vpop.f32.mrf.mxu0
      %v2590 = vadd.f32 0.0, %v2589
      %v2591 = vpop.f32.mrf.mxu0
      %v2592 = vadd.f32 0.0, %v2591
      %v2593 = vpop.f32.mrf.mxu0
      %v2594 = vadd.f32 0.0, %v2593
      %2595 = vmatprep.mubr.bf16.mxu0 0
      %2596 = vmatmul.mubr.bf16.gmra.mxu0 %v2498
      %v2597 = vpop.f32.mrf.mxu0
      %v2598 = vadd.f32 0.0, %v2597
      %v2599 = vpop.f32.mrf.mxu0
      %v2600 = vadd.f32 0.0, %v2599
      %v2601 = vpop.f32.mrf.mxu0
      %v2602 = vadd.f32 0.0, %v2601
      %v2603 = vpop.f32.mrf.mxu0
      %v2604 = vadd.f32 0.0, %v2603
      %2605 = vmatprep.mubr.bf16.mxu0 0
      %2606 = vmatmul.mubr.bf16.gmra.mxu0 %v2501
      %v2607 = vpop.f32.mrf.mxu0
      %v2608 = vadd.f32 0.0, %v2607
      %v2609 = vpop.f32.mrf.mxu0
      %v2610 = vadd.f32 0.0, %v2609
      %v2611 = vpop.f32.mrf.mxu0
      %v2612 = vadd.f32 0.0, %v2611
      %v2613 = vpop.f32.mrf.mxu0
      %v2614 = vadd.f32 0.0, %v2613
      %2615 = vdwg.mxu0
      %v2616 = vmax.f32 %v2538, %v2540
      %2617 = vmax.xlane.f32.xlu0 %v2616
      %v2618 = vpop.xlane.xlu0 %2617
      %v2619 = vmax.f32 %v2542, %v2544
      %2620 = vmax.xlane.f32.xlu0 %v2619
      %v2621 = vpop.xlane.xlu0 %2620
      %v2622 = vmax.f32 %v2548, %v2550
      %2623 = vmax.xlane.f32.xlu0 %v2622
      %v2624 = vpop.xlane.xlu0 %2623
      %v2625 = vmax.f32 %v2552, %v2554
      %2626 = vmax.xlane.f32.xlu0 %v2625
      %v2627 = vpop.xlane.xlu0 %2626
      %v2628 = vmax.f32 %v2558, %v2560
      %2629 = vmax.xlane.f32.xlu0 %v2628
      %v2630 = vpop.xlane.xlu0 %2629
      %v2631 = vmax.f32 %v2562, %v2564
      %2632 = vmax.xlane.f32.xlu0 %v2631
      %v2633 = vpop.xlane.xlu0 %2632
      %v2634 = vmax.f32 %v2568, %v2570
      %2635 = vmax.xlane.f32.xlu0 %v2634
      %v2636 = vpop.xlane.xlu0 %2635
      %v2637 = vmax.f32 %v2572, %v2574
      %2638 = vmax.xlane.f32.xlu0 %v2637
      %v2639 = vpop.xlane.xlu0 %2638
      %v2640 = vmax.f32 %v2578, %v2580
      %2641 = vmax.xlane.f32.xlu0 %v2640
      %v2642 = vpop.xlane.xlu0 %2641
      %v2643 = vmax.f32 %v2582, %v2584
      %2644 = vmax.xlane.f32.xlu0 %v2643
      %v2645 = vpop.xlane.xlu0 %2644
      %v2646 = vmax.f32 %v2588, %v2590
      %2647 = vmax.xlane.f32.xlu0 %v2646
      %v2648 = vpop.xlane.xlu0 %2647
      %v2649 = vmax.f32 %v2592, %v2594
      %2650 = vmax.xlane.f32.xlu0 %v2649
      %v2651 = vpop.xlane.xlu0 %2650
      %v2652 = vmax.f32 %v2598, %v2600
      %2653 = vmax.xlane.f32.xlu0 %v2652
      %v2654 = vpop.xlane.xlu0 %2653
      %v2655 = vmax.f32 %v2602, %v2604
      %2656 = vmax.xlane.f32.xlu0 %v2655
      %v2657 = vpop.xlane.xlu0 %2656
      %v2658 = vmax.f32 %v2608, %v2610
      %2659 = vmax.xlane.f32.xlu0 %v2658
      %v2660 = vpop.xlane.xlu0 %2659
      %v2661 = vmax.f32 %v2612, %v2614
      %2662 = vmax.xlane.f32.xlu0 %v2661
      %v2663 = vpop.xlane.xlu0 %2662
      %v2664 = vsub.f32 %v2538, %v2618
      %v2665 = vsub.f32 %v2540, %v2618
      %v2666 = vsub.f32 %v2542, %v2621
      %v2667 = vsub.f32 %v2544, %v2621
      %v2668 = vsub.f32 %v2548, %v2624
      %v2669 = vsub.f32 %v2550, %v2624
      %v2670 = vsub.f32 %v2552, %v2627
      %v2671 = vsub.f32 %v2554, %v2627
      %v2672 = vsub.f32 %v2558, %v2630
      %v2673 = vsub.f32 %v2560, %v2630
      %v2674 = vsub.f32 %v2562, %v2633
      %v2675 = vsub.f32 %v2564, %v2633
      %v2676 = vsub.f32 %v2568, %v2636
      %v2677 = vsub.f32 %v2570, %v2636
      %v2678 = vsub.f32 %v2572, %v2639
      %v2679 = vsub.f32 %v2574, %v2639
      %v2680 = vsub.f32 %v2578, %v2642
      %v2681 = vsub.f32 %v2580, %v2642
      %v2682 = vsub.f32 %v2582, %v2645
      %v2683 = vsub.f32 %v2584, %v2645
      %v2684 = vsub.f32 %v2588, %v2648
      %v2685 = vsub.f32 %v2590, %v2648
      %v2686 = vsub.f32 %v2592, %v2651
      %v2687 = vsub.f32 %v2594, %v2651
      %v2688 = vsub.f32 %v2598, %v2654
      %v2689 = vsub.f32 %v2600, %v2654
      %v2690 = vsub.f32 %v2602, %v2657
      %v2691 = vsub.f32 %v2604, %v2657
      %v2692 = vsub.f32 %v2608, %v2660
      %v2693 = vsub.f32 %v2610, %v2660
      %v2694 = vsub.f32 %v2612, %v2663
      %v2695 = vsub.f32 %v2614, %v2663
      %v2696 = vmul.f32 %v2664, 1.442695
      %v2697 = vpow.pop %v2696
      %v2698 = vmul.f32 %v2665, 1.442695
      %v2699 = vpow.pop %v2698
      %v2700 = vmul.f32 %v2666, 1.442695
      %v2701 = vpow.pop %v2700
      %v2702 = vmul.f32 %v2667, 1.442695
      %v2703 = vpow.pop %v2702
      %v2704 = vmul.f32 %v2668, 1.442695
      %v2705 = vpow.pop %v2704
      %v2706 = vmul.f32 %v2669, 1.442695
      %v2707 = vpow.pop %v2706
      %v2708 = vmul.f32 %v2670, 1.442695
      %v2709 = vpow.pop %v2708
      %v2710 = vmul.f32 %v2671, 1.442695
      %v2711 = vpow.pop %v2710
      %v2712 = vmul.f32 %v2672, 1.442695
      %v2713 = vpow.pop %v2712
      %v2714 = vmul.f32 %v2673, 1.442695
      %v2715 = vpow.pop %v2714
      %v2716 = vmul.f32 %v2674, 1.442695
      %v2717 = vpow.pop %v2716
      %v2718 = vmul.f32 %v2675, 1.442695
      %v2719 = vpow.pop %v2718
      %v2720 = vmul.f32 %v2676, 1.442695
      %v2721 = vpow.pop %v2720
      %v2722 = vmul.f32 %v2677, 1.442695
      %v2723 = vpow.pop %v2722
      %v2724 = vmul.f32 %v2678, 1.442695
      %v2725 = vpow.pop %v2724
      %v2726 = vmul.f32 %v2679, 1.442695
      %v2727 = vpow.pop %v2726
      %v2728 = vmul.f32 %v2680, 1.442695
      %v2729 = vpow.pop %v2728
      %v2730 = vmul.f32 %v2681, 1.442695
      %v2731 = vpow.pop %v2730
      %v2732 = vmul.f32 %v2682, 1.442695
      %v2733 = vpow.pop %v2732
      %v2734 = vmul.f32 %v2683, 1.442695
      %v2735 = vpow.pop %v2734
      %v2736 = vmul.f32 %v2684, 1.442695
      %v2737 = vpow.pop %v2736
      %v2738 = vmul.f32 %v2685, 1.442695
      %v2739 = vpow.pop %v2738
      %v2740 = vmul.f32 %v2686, 1.442695
      %v2741 = vpow.pop %v2740
      %v2742 = vmul.f32 %v2687, 1.442695
      %v2743 = vpow.pop %v2742
      %v2744 = vmul.f32 %v2688, 1.442695
      %v2745 = vpow.pop %v2744
      %v2746 = vmul.f32 %v2689, 1.442695
      %v2747 = vpow.pop %v2746
      %v2748 = vmul.f32 %v2690, 1.442695
      %v2749 = vpow.pop %v2748
      %v2750 = vmul.f32 %v2691, 1.442695
      %v2751 = vpow.pop %v2750
      %v2752 = vmul.f32 %v2692, 1.442695
      %v2753 = vpow.pop %v2752
      %v2754 = vmul.f32 %v2693, 1.442695
      %v2755 = vpow.pop %v2754
      %v2756 = vmul.f32 %v2694, 1.442695
      %v2757 = vpow.pop %v2756
      %v2758 = vmul.f32 %v2695, 1.442695
      %v2759 = vpow.pop %v2758
      %v2760 = vpack.c.bf16 %v2701, %v2697
      %v2761 = vpack.c.bf16 %v2703, %v2699
      %v2762 = vpack.c.bf16 %v2709, %v2705
      %v2763 = vpack.c.bf16 %v2711, %v2707
      %v2764 = vpack.c.bf16 %v2717, %v2713
      %v2765 = vpack.c.bf16 %v2719, %v2715
      %v2766 = vpack.c.bf16 %v2725, %v2721
      %v2767 = vpack.c.bf16 %v2727, %v2723
      %v2768 = vpack.c.bf16 %v2733, %v2729
      %v2769 = vpack.c.bf16 %v2735, %v2731
      %v2770 = vpack.c.bf16 %v2741, %v2737
      %v2771 = vpack.c.bf16 %v2743, %v2739
      %v2772 = vpack.c.bf16 %v2749, %v2745
      %v2773 = vpack.c.bf16 %v2751, %v2747
      %v2774 = vpack.c.bf16 %v2757, %v2753
      %v2775 = vpack.c.bf16 %v2759, %v2755
      %v2780 = vunpack.c.l.b16 %v2439
      %v2781 = vunpack.c.h.b16 %v2439
      %v2782 = vunpack.c.l.b16 %v2440
      %v2783 = vunpack.c.h.b16 %v2440
      %v2784 = vunpack.c.l.b16 %v2441
      %v2785 = vunpack.c.h.b16 %v2441
      %v2786 = vunpack.c.l.b16 %v2442
      %v2787 = vunpack.c.h.b16 %v2442
      %v2788 = vpack.c.b16 %v2782, %v2780
      %v2789 = vpack.c.b16 %v2783, %v2781
      %v2790 = vpack.c.b16 %v2786, %v2784
      %v2791 = vpack.c.b16 %v2787, %v2785
      %2796 = vmatprep.subr.bf16.mxu0 %v2775
      %2797 = vmatpush1.bf16.xpose.msra.mxu0 %v2774
      %2798 = vmatprep.subr.bf16.mxu0 %v2773
      %2799 = vmatpush1.bf16.xpose.msra.mxu0 %v2772
      %2800 = vmatprep.subr.bf16.mxu0 %v2771
      %2801 = vmatpush1.bf16.xpose.msra.mxu0 %v2770
      %2802 = vmatprep.subr.bf16.mxu0 %v2769
      %2803 = vmatpush1.bf16.xpose.msra.mxu0 %v2768
      %2804 = vmatprep.subr.bf16.mxu0 %v2767
      %2805 = vmatpush1.bf16.xpose.msra.mxu0 %v2766
      %2806 = vmatprep.subr.bf16.mxu0 %v2765
      %2807 = vmatpush1.bf16.xpose.msra.mxu0 %v2764
      %2808 = vmatprep.subr.bf16.mxu0 %v2763
      %2809 = vmatpush1.bf16.xpose.msra.mxu0 %v2762
      %2810 = vmatprep.subr.bf16.mxu0 %v2761
      %2811 = vmatpush1.bf16.xpose.msra.mxu0 %v2760
      %2812 = vmatprep.subr.bf16.mxu0 0
      %2813 = vmatpush2.bf16.xpose.msra.mxu0 0
      %2814 = vmatprep.subr.bf16.mxu0 0
      %2815 = vmatpush2.bf16.xpose.msra.mxu0 0
      %2816 = vmatprep.subr.bf16.mxu0 0
      %2817 = vmatpush2.bf16.xpose.msra.mxu0 0
      %2818 = vmatprep.subr.bf16.mxu0 0
      %2819 = vmatpush2.bf16.xpose.msra.mxu0 0
      %2820 = vmatprep.subr.bf16.mxu0 0
      %2821 = vmatpush2.bf16.xpose.msra.mxu0 0
      %2822 = vmatprep.subr.bf16.mxu0 0
      %2823 = vmatpush2.bf16.xpose.msra.mxu0 0
      %2824 = vmatprep.subr.bf16.mxu0 0
      %2825 = vmatpush2.bf16.xpose.msra.mxu0 0
      %2826 = vmatprep.subr.bf16.mxu0 0
      %2827 = vmatpush2.bf16.xpose.msra.mxu0 0
      %2828 = vmatprep.mubr.bf16.mxu0 %v2789
      %2829 = vmatmul.mubr.bf16.gmra.mxu0 %v2788
      %v2830 = vpop.f32.mrf.mxu0
      %v2831 = vadd.f32 0.0, %v2830
      %v2832 = vpop.f32.mrf.mxu0
      %v2833 = vpop.f32.mrf.mxu0
      %v2834 = vadd.f32 0.0, %v2833
      %v2835 = vpop.f32.mrf.mxu0
      %2836 = vmatprep.mubr.bf16.mxu0 %v2791
      %2837 = vmatmul.mubr.bf16.gmra.mxu0 %v2790
      %v2838 = vpop.f32.mrf.mxu0
      %v2839 = vadd.f32 0.0, %v2838
      %v2840 = vpop.f32.mrf.mxu0
      %v2841 = vpop.f32.mrf.mxu0
      %v2842 = vadd.f32 0.0, %v2841
      %v2843 = vpop.f32.mrf.mxu0
      %2844 = vdwg.mxu0
      %2845 = vmatprep.subr.bf16.mxu0 %v2775
      %2846 = vmatpush1.bf16.xpose.msra.mxu0 %v2774
      %2847 = vmatprep.subr.bf16.mxu0 %v2773
      %2848 = vmatpush1.bf16.xpose.msra.mxu0 %v2772
      %2849 = vmatprep.subr.bf16.mxu0 %v2771
      %2850 = vmatpush1.bf16.xpose.msra.mxu0 %v2770
      %2851 = vmatprep.subr.bf16.mxu0 %v2769
      %2852 = vmatpush1.bf16.xpose.msra.mxu0 %v2768
      %2853 = vmatprep.subr.bf16.mxu0 %v2767
      %2854 = vmatpush1.bf16.xpose.msra.mxu0 %v2766
      %2855 = vmatprep.subr.bf16.mxu0 %v2765
      %2856 = vmatpush1.bf16.xpose.msra.mxu0 %v2764
      %2857 = vmatprep.subr.bf16.mxu0 %v2763
      %2858 = vmatpush1.bf16.xpose.msra.mxu0 %v2762
      %2859 = vmatprep.subr.bf16.mxu0 %v2761
      %2860 = vmatpush1.bf16.xpose.msra.mxu0 %v2760
      %2861 = vmatprep.subr.bf16.mxu0 0
      %2862 = vmatpush2.bf16.xpose.msra.mxu0 0
      %2863 = vmatprep.subr.bf16.mxu0 0
      %2864 = vmatpush2.bf16.xpose.msra.mxu0 0
      %2865 = vmatprep.subr.bf16.mxu0 0
      %2866 = vmatpush2.bf16.xpose.msra.mxu0 0
      %2867 = vmatprep.subr.bf16.mxu0 0
      %2868 = vmatpush2.bf16.xpose.msra.mxu0 0
      %2869 = vmatprep.subr.bf16.mxu0 0
      %2870 = vmatpush2.bf16.xpose.msra.mxu0 0
      %2871 = vmatprep.subr.bf16.mxu0 0
      %2872 = vmatpush2.bf16.xpose.msra.mxu0 0
      %2873 = vmatprep.subr.bf16.mxu0 0
      %2874 = vmatpush2.bf16.xpose.msra.mxu0 0
      %2875 = vmatprep.subr.bf16.mxu0 0
      %2876 = vmatpush2.bf16.xpose.msra.mxu0 0
      %2877 = vmatprep.mubr.bf16.mxu0 1065369472
      %2878 = vmatmul.mubr.bf16.gmra.mxu0 1065369472
      %v2879 = vpop.f32.mrf.mxu0
      %v2880 = vadd.f32 0.0, %v2879
      %v2881 = vpop.f32.mrf.mxu0
      %v2882 = vpop.f32.mrf.mxu0
      %v2883 = vpop.f32.mrf.mxu0
      %2884 = vdwg.mxu0
      %v2885 = vrcp.pop %v2880
      %v2886 = vlaneseq
      %v2887 = vshrl.u32 %v2886, 7
      %v2888 = vsub.s32 0, %v2887
      %v2889 = vrot.slane %v2885, %v2888
      %v2890 = vmul.f32 %v2831, %v2889
      %v2891 = vmul.f32 %v2834, %v2889
      %v2892 = vmul.f32 %v2839, %v2889
      %v2893 = vmul.f32 %v2842, %v2889
      %2894 = vst [vmem:[#allocation4 + $0x60] sm:$0xff] %v2890
      %2895 = vst [vmem:[#allocation4 + $0x68] sm:$0xff] %v2891
      %2896 = vst [vmem:[#allocation4 + $0x70] sm:$0xff] %v2892
      %2897 = vst [vmem:[#allocation4 + $0x78] sm:$0xff] %v2893
      %v2898 = vld [vmem:[#allocation4] sm:$0xff]
      %v2899 = vld [vmem:[#allocation4 + $0x8] sm:$0xff]
      %v2900 = vld [vmem:[#allocation4 + $0x10] sm:$0xff]
      %v2901 = vld [vmem:[#allocation4 + $0x18] sm:$0xff]
      %v2902 = vld [vmem:[#allocation4 + $0x20] sm:$0xff]
      %v2903 = vld [vmem:[#allocation4 + $0x28] sm:$0xff]
      %v2904 = vld [vmem:[#allocation4 + $0x30] sm:$0xff]
      %v2905 = vld [vmem:[#allocation4 + $0x38] sm:$0xff]
      %v2906 = vld [vmem:[#allocation4 + $0x40] sm:$0xff]
      %v2907 = vld [vmem:[#allocation4 + $0x48] sm:$0xff]
      %v2908 = vld [vmem:[#allocation4 + $0x50] sm:$0xff]
      %v2909 = vld [vmem:[#allocation4 + $0x58] sm:$0xff]
      %v2910 = vld [vmem:[#allocation4 + $0x60] sm:$0xff]
      %v2911 = vld [vmem:[#allocation4 + $0x68] sm:$0xff]
      %v2912 = vld [vmem:[#allocation4 + $0x70] sm:$0xff]
      %v2913 = vld [vmem:[#allocation4 + $0x78] sm:$0xff]
      %v2914 = vpack.c.bf16 %v2899, %v2898
      %v2915 = vpack.c.bf16 %v2901, %v2900
      %v2916 = vpack.c.bf16 %v2903, %v2902
      %v2917 = vpack.c.bf16 %v2905, %v2904
      %v2918 = vpack.c.bf16 %v2907, %v2906
      %v2919 = vpack.c.bf16 %v2909, %v2908
      %v2920 = vpack.c.bf16 %v2911, %v2910
      %v2921 = vpack.c.bf16 %v2913, %v2912
      %v2922 = vld [vmem:[%s2] sm:$0x3]
      %v2923 = vld [vmem:[%s3] sm:$0xf]
      %2925 = vset.pattern.permute.xlu0 0
      %2926 = vperm.xlu0 %2925, %v2923
      %v2927 = vpop.permute.xlu0 %2926
      %2929 = vmatprep.subr.bf16.mxu0 0
      %2930 = vmatpush1.bf16.msra.mxu0 %v2921
      %2931 = vmatprep.subr.bf16.mxu0 0
      %2932 = vmatpush1.bf16.msra.mxu0 %v2920
      %2933 = vmatprep.subr.bf16.mxu0 0
      %2934 = vmatpush1.bf16.msra.mxu0 %v2919
      %2935 = vmatprep.subr.bf16.mxu0 0
      %2936 = vmatpush1.bf16.msra.mxu0 %v2918
      %2937 = vmatprep.subr.bf16.mxu0 0
      %2938 = vmatpush1.bf16.msra.mxu0 %v2917
      %2939 = vmatprep.subr.bf16.mxu0 0
      %2940 = vmatpush1.bf16.msra.mxu0 %v2916
      %2941 = vmatprep.subr.bf16.mxu0 0
      %2942 = vmatpush1.bf16.msra.mxu0 %v2915
      %2943 = vmatprep.subr.bf16.mxu0 0
      %2944 = vmatpush1.bf16.msra.mxu0 %v2914
      %2945 = vmatprep.subr.bf16.mxu0 0
      %2946 = vmatpush2.bf16.msra.mxu0 0
      %2947 = vmatprep.subr.bf16.mxu0 0
      %2948 = vmatpush2.bf16.msra.mxu0 0
      %2949 = vmatprep.subr.bf16.mxu0 0
      %2950 = vmatpush2.bf16.msra.mxu0 0
      %2951 = vmatprep.subr.bf16.mxu0 0
      %2952 = vmatpush2.bf16.msra.mxu0 0
      %2953 = vmatprep.subr.bf16.mxu0 0
      %2954 = vmatpush2.bf16.msra.mxu0 0
      %2955 = vmatprep.subr.bf16.mxu0 0
      %2956 = vmatpush2.bf16.msra.mxu0 0
      %2957 = vmatprep.subr.bf16.mxu0 0
      %2958 = vmatpush2.bf16.msra.mxu0 0
      %2959 = vmatprep.subr.bf16.mxu0 0
      %2960 = vmatpush2.bf16.msra.mxu0 0
      %2961 = vmatprep.mubr.bf16.mxu0 0
      %2962 = vmatmul.mubr.bf16.gmra.mxu0 %v2922
      %v2963 = vpop.f32.mrf.mxu0
      %v2964 = vadd.f32 %v2927, %v2963
      %v2965 = vpop.f32.mrf.mxu0
      %v2966 = vpop.f32.mrf.mxu0
      %v2967 = vpop.f32.mrf.mxu0
      %2968 = vdwg.mxu0
      %2969 = vst [vmem:[%s217] sm:$0xf] %v2964
      %p2970 = scmp.lt.s32.totalorder %s19, 1
      %s2971 = scalar_select %p2970, %s19, 1
      %p2972 = scmp.lt.s32.totalorder %s20, 1
      %s2973 = scalar_select %p2972, %s20, 1
      %s2974 = smul.addr %s2971, 2
      %s2975 = sadd.s32 %s2973, %s2974
      %s2976 = smul.addr %s2975, 4
      %s2977 = scalar_lea.vmem %s4, %s2976
      // Predicated region
      $region41: #{attention_forward.1} parent=35 // pred_check
        %p2978 = pneg %p136
      $region42: #{attention_forward.1} parent=35 // pred_check_branch
        %2980 = sbr.rel (%p2978) target = $region44
      $region43: #{attention_forward.1} parent=35 // pred_region
        _
      $region44: #{attention_forward.1} parent=35 // pred_fallthru
        _
    $region36: #{attention_forward.1} parent=5 // pred_fallthru
      _
    %p2981 = scmp.le.s32.totalorder 2, %s10
    // Predicated region
    $region45: #{attention_forward.1} parent=5 // pred_check
      %p2982 = pneg %p2981
    $region46: #{attention_forward.1} parent=5 // pred_check_branch
      %2984 = sbr.rel (%p2982) target = $region48
    $region47: #{attention_forward.1} parent=5 // pred_region
      %s2985 = ssub.s32 %s10, 2
      // Predicated region
      $region49: #{attention_forward.1} parent=47 // pred_check
        %p2986 = pneg %p142
      $region50: #{attention_forward.1} parent=47 // pred_check_branch
        %2988 = sbr.rel (%p2986) target = $region52
      $region51: #{attention_forward.1} parent=47 // pred_region
        %p2989 = scmp.lt.s32.totalorder %s21, 1
        %s2990 = scalar_select %p2989, %s21, 1
        %p2991 = scmp.lt.s32.totalorder %s22, 1
        %s2992 = scalar_select %p2991, %s22, 1
        %s2993 = smul.addr %s2990, 2
        %s2994 = sadd.s32 %s2992, %s2993
        %s2995 = smul.addr %s2994, 4
        %s2996 = scalar_lea.vmem %s4, %s2995
      $region52: #{attention_forward.1} parent=47 // pred_fallthru
        _
    $region48: #{attention_forward.1} parent=5 // pred_fallthru
      _
  $region6: #{attention_forward.1} parent=0 // loop_footer
    %s14 = sadd.s32 1, %s10
  $region7: #{attention_forward.1} parent=0 // loop_footer_branch
    %9 = sbr.rel target = $region3
  $region8: #{attention_forward.1} parent=0 // loop_exit
    _

</llo_original>
